<compile_context>
chip_gen: v7x
topology: tpu7x:2x2x1
jax: 0.10.0
libtpu: 0.0.40
codegen_flags: <defaults>
</compile_context>

<pallas_src>
import functools

import numpy as np
import jax
import jax.numpy as jnp
from jax.experimental import pallas as pl
from jax.experimental.pallas import tpu as pltpu


_VMEM_BUDGET = 20 * 1024 * 1024   # conservative per-step budget: fits v7x (64 MiB phys) w/ headroom
_VMEM_LIMIT = 32 * 1024 * 1024    # explicit scoped-VMEM limit (safe on v5e / v6e / v7x)


def _interp_matrix(in_size: int, out_size: int) -> np.ndarray:
    """1-D bilinear interpolation matrix, align_corners=True (PyTorch semantics)."""
    A = np.zeros((out_size, in_size), dtype=np.float32)
    if out_size == 1 or in_size == 1:
        A[:, 0] = 1.0
        return A
    scale = (in_size - 1) / (out_size - 1)
    for i in range(out_size):
        src = i * scale
        i0 = min(int(np.floor(src)), in_size - 1)
        i1 = min(i0 + 1, in_size - 1)
        f = src - i0
        A[i, i0] += 1.0 - f
        A[i, i1] += f
    return A


def _tap_masks(H: int, W: int) -> np.ndarray:
    """(9, H*W) validity masks for the 9 shifted 3x3 taps on the flattened (h, w) axis."""
    m = np.zeros((9, H * W), dtype=np.float32)
    hh, ww = np.meshgrid(np.arange(H), np.arange(W), indexing="ij")
    for kh in range(3):
        for kw in range(3):
            dh, dw = kh - 1, kw - 1
            ok = (hh + dh >= 0) & (hh + dh < H) & (ww + dw >= 0) & (ww + dw < W)
            m[kh * 3 + kw] = ok.reshape(-1).astype(np.float32)
    return m


def _upsample_block_kernel(x_ref, w_ref, b_ref, mask_ref, kront_ref, out_ref,
                           *, H, W, Cin, Cout, B_TILE):
    # x_ref    : (Cin, B_TILE*H*W)      activations, batch folded into the lane dim
    # w_ref    : (9, Cout, Cin)         conv weights, one (Cout, Cin) slab per tap
    # b_ref    : (Cout, 1)              conv bias
    # mask_ref : (9, 1, B_TILE*H*W)     per-tap halo validity masks (tiled per batch)
    # kront_ref: (H*W, 4*H*W)           kron(A_h, A_w)^T bilinear x2 upsample matrix
    # out_ref  : (B_TILE*Cout, 4*H*W)   lane-dense output slab
    HW = H * W
    BHW = B_TILE * HW

    x2 = x_ref[...]                                            # (Cin, BHW)

    # 3x3 "SAME" conv as 9 accumulating K=Cin matmuls on rolled + masked inputs.
    # pltpu.roll keeps the aligned lane layout (runs in the XLU slot); the masks zero
    # both the zero-padding halo and any lanes wrapped across image/batch boundaries.
    y = None
    for kh in range(3):
        for kw in range(3):
            t = kh * 3 + kw
            d = (kh - 1) * W + (kw - 1)      # source offset on the flattened (h, w) axis
            if d == 0:
                tap = x2                      # center tap: no shift, mask is all-ones
            else:
                shifted = pltpu.roll(x2, (-d) % BHW, axis=1)   # out[k] = in[k + d]
                tap = shifted * mask_ref[t]                     # (Cin, BHW)
            part = jnp.dot(w_ref[t], tap, preferred_element_type=jnp.float32)
            y = part if y is None else y + part                 # (Cout, BHW)

    y = jnp.maximum(y + b_ref[...], 0.0)                        # bias + ReLU

    # Restack batch from lanes to sublanes: (Cout, B*HW) -> (B*Cout, HW).
    # Each piece is a 128-aligned lane slice and a full-Cout sublane chunk.
    if B_TILE > 1:
        y = jnp.concatenate([y[:, b * HW:(b + 1) * HW] for b in range(B_TILE)], axis=0)

    # Fused bilinear x2 upsample (align_corners=True): one lane-dense matmul against
    # kron(A_h, A_w)^T, landing directly in the output slab (single unmasked store).
    out_ref[...] = jnp.dot(y, kront_ref[...], preferred_element_type=jnp.float32)


def _footprint_bytes(bt, Cin, Cout, HW):
    """Rough per-grid-step VMEM footprint (double-buffered pipeline blocks + live values)."""
    HoWo = 4 * HW
    io = 2 * (Cin * bt * HW + bt * Cout * HoWo) * 4                       # pipelined x / out blocks
    const = 2 * (9 * Cout * Cin + Cout + 9 * bt * HW + HW * HoWo) * 4     # weights/bias/masks/kron
    live = (4 * Cin * bt * HW + 4 * Cout * bt * HW + 2 * bt * Cout * HoWo) * 4
    return io + const + live


def _pick_batch_tile(N, Cin, Cout, HW):
    def ok(bt):
        if N % bt:
            return False
        if bt != N and (bt * HW) % 128 != 0:     # lane-blocking constraint on the input
            return False
        if bt != N and (bt * Cout) % 8 != 0:     # sublane-blocking constraint on the output
            return False
        return _footprint_bytes(bt, Cin, Cout, HW) <= _VMEM_BUDGET

    feasible = [bt for bt in range(1, N + 1) if ok(bt)]
    if not feasible:
        return None
    multi_step = [bt for bt in feasible if N // bt >= 2]   # keep >=2 grid steps (megacore)
    return max(multi_step) if multi_step else max(feasible)


def upsample_block(x_nchw, w_oihw, bias, *, batch_tile=None):
    """Forward pass of UpsampleBlock: Conv3x3(pad=1) + bias + ReLU, bilinear x2 upsample
    (align_corners=True).  x_nchw: (N, Cin, H, W) f32, w_oihw: (Cout, Cin, 3, 3) PyTorch
    OIHW, bias: (Cout,).  Returns (N, Cout, 2H, 2W) f32 (NCHW)."""
    N, Cin, H, W = x_nchw.shape
    Cout = w_oihw.shape[0]
    assert w_oihw.shape == (Cout, Cin, 3, 3)
    HW, Ho, Wo = H * W, 2 * H, 2 * W
    HoWo = Ho * Wo

    if batch_tile is None:
        batch_tile = _pick_batch_tile(N, Cin, Cout, HW)
    if batch_tile is None:
        # TODO(synk): large-spatial path (tile the upsample over output rows using the
        # separable A_w / A_h stages) for sizes where the fused kron(A_h, A_w) constant
        # no longer fits VMEM (notably v7x's 64 MiB) or H*W is not lane-blockable.
        raise NotImplementedError("spatial size too large for the fused-kron upsample path")
    assert N % batch_tile == 0
    bt = batch_tile
    BHW = bt * HW

    # Host-side (one-time) repacks: activations go to (Cin, N*HW) so batch rides the
    # lane dim and the kernel never needs to relayout the conv RHS.
    x_cb = jnp.transpose(x_nchw.reshape(N, Cin, HW).astype(jnp.float32),
                         (1, 0, 2)).reshape(Cin, N * HW)
    w9 = jnp.transpose(w_oihw.astype(jnp.float32), (2, 3, 0, 1)).reshape(9, Cout, Cin)
    b2 = bias.reshape(Cout, 1).astype(jnp.float32)
    masks = jnp.asarray(np.tile(_tap_masks(H, W), (1, bt))).reshape(9, 1, BHW)
    A_h = _interp_matrix(H, Ho)
    A_w = _interp_matrix(W, Wo)
    kront = jnp.asarray(np.kron(A_h, A_w).T)                      # (HW, 4*HW)

    kernel = functools.partial(_upsample_block_kernel, H=H, W=W, Cin=Cin, Cout=Cout,
                               B_TILE=bt)

    flops = 2 * N * (9 * Cout * Cin * HW + Cout * HW * HoWo)
    bytes_accessed = 4 * (Cin * N * HW + N * Cout * HoWo
                          + w9.size + b2.size + masks.size + kront.size)

    out2d = pl.pallas_call(
        kernel,
        out_shape=jax.ShapeDtypeStruct((N * Cout, HoWo), jnp.float32),
        grid_spec=pltpu.PrefetchScalarGridSpec(
            num_scalar_prefetch=0,
            grid=(N // bt,),
            in_specs=[
                pl.BlockSpec((Cin, BHW), lambda n: (0, n)),
                pl.BlockSpec((9, Cout, Cin), lambda n: (0, 0, 0)),
                pl.BlockSpec((Cout, 1), lambda n: (0, 0)),
                pl.BlockSpec((9, 1, BHW), lambda n: (0, 0, 0)),
                pl.BlockSpec((HW, HoWo), lambda n: (0, 0)),
            ],
            out_specs=pl.BlockSpec((bt * Cout, HoWo), lambda n: (n, 0)),
        ),
        compiler_params=pltpu.CompilerParams(
            dimension_semantics=("parallel",),
            vmem_limit_bytes=_VMEM_LIMIT),
        cost_estimate=pl.CostEstimate(flops=int(flops), transcendentals=0,
                                      bytes_accessed=int(bytes_accessed)),
    )(x_cb, w9, b2, masks, kront)

    # Free reshape back to NCHW (N, Cout, 2H, 2W): rows are (b, cout), cols are (u, v).
    return out2d.reshape(N, Cout, Ho, Wo)


def _reference(x_nchw, w_oihw, bias, A_h, A_w):
    """Pure-JAX reference of the same math (f32, highest precision)."""
    y = jax.lax.conv_general_dilated(
        x_nchw, w_oihw, window_strides=(1, 1), padding="SAME",
        dimension_numbers=("NCHW", "OIHW", "NCHW"),
        precision=jax.lax.Precision.HIGHEST)
    y = jax.nn.relu(y + bias[None, :, None, None])
    return jnp.einsum("uh,vw,nchw->ncuv", A_h, A_w, y,
                      precision=jax.lax.Precision.HIGHEST)


if __name__ == "__main__":
    # Small deterministic example: N=4, Cin=4, Cout=8, H=W=16.
    # batch_tile auto-selects 2 -> grid of 2 steps (megacore-friendly), batch folded
    # into the matmul lane dimension inside each step.
    N, Cin, Cout, H, W = 4, 4, 8, 16, 16

    key = jax.random.PRNGKey(0)
    kx, kw, kb = jax.random.split(key, 3)
    x = jax.random.normal(kx, (N, Cin, H, W), dtype=jnp.float32)
    # Conv2d(Cin, Cout, 3, padding=1) weight in PyTorch OIHW layout + bias.
    w = 0.1 * jax.random.normal(kw, (Cout, Cin, 3, 3), dtype=jnp.float32)
    b = 0.1 * jax.random.normal(kb, (Cout,), dtype=jnp.float32)

    out = upsample_block(x, w, b)
    out = jax.block_until_ready(out)

    A_h = jnp.asarray(_interp_matrix(H, 2 * H))
    A_w = jnp.asarray(_interp_matrix(W, 2 * W))
    ref = _reference(x, w, b, A_h, A_w)

    assert out.shape == (N, Cout, 2 * H, 2 * W), out.shape
    max_err = float(jnp.max(jnp.abs(out - ref)))
    assert jnp.allclose(out, ref, atol=2e-4, rtol=2e-4), max_err

    print("KERNEL_OK")
</pallas_src>

<mosaic_0001>
module attributes {stable_mosaic.version = 11 : i64} {
  func.func @_upsample_block_kernel(%arg0: i32, %arg1: memref<4x512xf32, #tpu.memory_space<vmem>>, %arg2: memref<9x8x4xf32, #tpu.memory_space<vmem>>, %arg3: memref<8x1xf32, #tpu.memory_space<vmem>>, %arg4: memref<9x1x512xf32, #tpu.memory_space<vmem>>, %arg5: memref<256x1024xf32, #tpu.memory_space<vmem>>, %arg6: memref<16x1024xf32, #tpu.memory_space<vmem>>) attributes {dimension_semantics = [#tpu.dimension_semantics<parallel>], iteration_bounds = array<i64: 2>, scalar_prefetch = 0 : i64, scratch_operands = 0 : i64, tpu.core_type = #tpu.core_type<tc>, window_params = [{transform_indices = @transform_0, window_bounds = array<i64: 4, 512>}, {pipeline_mode = #tpu.pipeline_mode<synchronous>, transform_indices = @transform_1, window_bounds = array<i64: 9, 8, 4>}, {pipeline_mode = #tpu.pipeline_mode<synchronous>, transform_indices = @transform_2, window_bounds = array<i64: 8, 1>}, {pipeline_mode = #tpu.pipeline_mode<synchronous>, transform_indices = @transform_3, window_bounds = array<i64: 9, 1, 512>}, {pipeline_mode = #tpu.pipeline_mode<synchronous>, transform_indices = @transform_4, window_bounds = array<i64: 256, 1024>}, {transform_indices = @transform_5, window_bounds = array<i64: 16, 1024>}]} {
    %c0 = arith.constant 0 : index
    %c0_0 = arith.constant 0 : index
    %0 = vector.load %arg1[%c0, %c0_0] : memref<4x512xf32, #tpu.memory_space<vmem>>, vector<4x512xf32>
    %c17_i32 = arith.constant 17 : i32
    %1 = tpu.dynamic_rotate %0 by %c17_i32 dim 1 : vector<4x512xf32>, i32 -> vector<4x512xf32>
    %c0_1 = arith.constant 0 : index
    %c0_2 = arith.constant 0 : index
    %c0_3 = arith.constant 0 : index
    %2 = vector.load %arg4[%c0_1, %c0_2, %c0_3] : memref<9x1x512xf32, #tpu.memory_space<vmem>>, vector<1x1x512xf32>
    %3 = vector.shape_cast %2 : vector<1x1x512xf32> to vector<1x512xf32>
    %4 = vector.broadcast %3 : vector<1x512xf32> to vector<4x512xf32>
    %5 = arith.mulf %1, %4 : vector<4x512xf32>
    %c0_4 = arith.constant 0 : index
    %c0_5 = arith.constant 0 : index
    %c0_6 = arith.constant 0 : index
    %6 = vector.load %arg2[%c0_4, %c0_5, %c0_6] : memref<9x8x4xf32, #tpu.memory_space<vmem>>, vector<1x8x4xf32>
    %7 = vector.shape_cast %6 : vector<1x8x4xf32> to vector<8x4xf32>
    %cst = arith.constant dense<0.000000e+00> : vector<8x512xf32>
    %8 = tpu.matmul %7, %5, %cst {dimension_numbers = #tpu.dot_dimension_numbers<[1], [0], [0], [1], [0, 0, 1, 1], [], []>} : vector<8x4xf32>, vector<4x512xf32>, vector<8x512xf32> -> vector<8x512xf32>
    %c16_i32 = arith.constant 16 : i32
    %9 = tpu.dynamic_rotate %0 by %c16_i32 dim 1 : vector<4x512xf32>, i32 -> vector<4x512xf32>
    %c1 = arith.constant 1 : index
    %c0_7 = arith.constant 0 : index
    %c0_8 = arith.constant 0 : index
    %10 = vector.load %arg4[%c1, %c0_7, %c0_8] : memref<9x1x512xf32, #tpu.memory_space<vmem>>, vector<1x1x512xf32>
    %11 = vector.shape_cast %10 : vector<1x1x512xf32> to vector<1x512xf32>
    %12 = vector.broadcast %11 : vector<1x512xf32> to vector<4x512xf32>
    %13 = arith.mulf %9, %12 : vector<4x512xf32>
    %c1_9 = arith.constant 1 : index
    %c0_10 = arith.constant 0 : index
    %c0_11 = arith.constant 0 : index
    %14 = vector.load %arg2[%c1_9, %c0_10, %c0_11] : memref<9x8x4xf32, #tpu.memory_space<vmem>>, vector<1x8x4xf32>
    %15 = vector.shape_cast %14 : vector<1x8x4xf32> to vector<8x4xf32>
    %cst_12 = arith.constant dense<0.000000e+00> : vector<8x512xf32>
    %16 = tpu.matmul %15, %13, %cst_12 {dimension_numbers = #tpu.dot_dimension_numbers<[1], [0], [0], [1], [0, 0, 1, 1], [], []>} : vector<8x4xf32>, vector<4x512xf32>, vector<8x512xf32> -> vector<8x512xf32>
    %17 = arith.addf %8, %16 : vector<8x512xf32>
    %c15_i32 = arith.constant 15 : i32
    %18 = tpu.dynamic_rotate %0 by %c15_i32 dim 1 : vector<4x512xf32>, i32 -> vector<4x512xf32>
    %c2 = arith.constant 2 : index
    %c0_13 = arith.constant 0 : index
    %c0_14 = arith.constant 0 : index
    %19 = vector.load %arg4[%c2, %c0_13, %c0_14] : memref<9x1x512xf32, #tpu.memory_space<vmem>>, vector<1x1x512xf32>
    %20 = vector.shape_cast %19 : vector<1x1x512xf32> to vector<1x512xf32>
    %21 = vector.broadcast %20 : vector<1x512xf32> to vector<4x512xf32>
    %22 = arith.mulf %18, %21 : vector<4x512xf32>
    %c2_15 = arith.constant 2 : index
    %c0_16 = arith.constant 0 : index
    %c0_17 = arith.constant 0 : index
    %23 = vector.load %arg2[%c2_15, %c0_16, %c0_17] : memref<9x8x4xf32, #tpu.memory_space<vmem>>, vector<1x8x4xf32>
    %24 = vector.shape_cast %23 : vector<1x8x4xf32> to vector<8x4xf32>
    %cst_18 = arith.constant dense<0.000000e+00> : vector<8x512xf32>
    %25 = tpu.matmul %24, %22, %cst_18 {dimension_numbers = #tpu.dot_dimension_numbers<[1], [0], [0], [1], [0, 0, 1, 1], [], []>} : vector<8x4xf32>, vector<4x512xf32>, vector<8x512xf32> -> vector<8x512xf32>
    %26 = arith.addf %17, %25 : vector<8x512xf32>
    %c1_i32 = arith.constant 1 : i32
    %27 = tpu.dynamic_rotate %0 by %c1_i32 dim 1 : vector<4x512xf32>, i32 -> vector<4x512xf32>
    %c3 = arith.constant 3 : index
    %c0_19 = arith.constant 0 : index
    %c0_20 = arith.constant 0 : index
    %28 = vector.load %arg4[%c3, %c0_19, %c0_20] : memref<9x1x512xf32, #tpu.memory_space<vmem>>, vector<1x1x512xf32>
    %29 = vector.shape_cast %28 : vector<1x1x512xf32> to vector<1x512xf32>
    %30 = vector.broadcast %29 : vector<1x512xf32> to vector<4x512xf32>
    %31 = arith.mulf %27, %30 : vector<4x512xf32>
    %c3_21 = arith.constant 3 : index
    %c0_22 = arith.constant 0 : index
    %c0_23 = arith.constant 0 : index
    %32 = vector.load %arg2[%c3_21, %c0_22, %c0_23] : memref<9x8x4xf32, #tpu.memory_space<vmem>>, vector<1x8x4xf32>
    %33 = vector.shape_cast %32 : vector<1x8x4xf32> to vector<8x4xf32>
    %cst_24 = arith.constant dense<0.000000e+00> : vector<8x512xf32>
    %34 = tpu.matmul %33, %31, %cst_24 {dimension_numbers = #tpu.dot_dimension_numbers<[1], [0], [0], [1], [0, 0, 1, 1], [], []>} : vector<8x4xf32>, vector<4x512xf32>, vector<8x512xf32> -> vector<8x512xf32>
    %35 = arith.addf %26, %34 : vector<8x512xf32>
    %c4 = arith.constant 4 : index
    %c0_25 = arith.constant 0 : index
    %c0_26 = arith.constant 0 : index
    %36 = vector.load %arg2[%c4, %c0_25, %c0_26] : memref<9x8x4xf32, #tpu.memory_space<vmem>>, vector<1x8x4xf32>
    %37 = vector.shape_cast %36 : vector<1x8x4xf32> to vector<8x4xf32>
    %cst_27 = arith.constant dense<0.000000e+00> : vector<8x512xf32>
    %38 = tpu.matmul %37, %0, %cst_27 {dimension_numbers = #tpu.dot_dimension_numbers<[1], [0], [0], [1], [0, 0, 1, 1], [], []>} : vector<8x4xf32>, vector<4x512xf32>, vector<8x512xf32> -> vector<8x512xf32>
    %39 = arith.addf %35, %38 : vector<8x512xf32>
    %c511_i32 = arith.constant 511 : i32
    %40 = tpu.dynamic_rotate %0 by %c511_i32 dim 1 : vector<4x512xf32>, i32 -> vector<4x512xf32>
    %c5 = arith.constant 5 : index
    %c0_28 = arith.constant 0 : index
    %c0_29 = arith.constant 0 : index
    %41 = vector.load %arg4[%c5, %c0_28, %c0_29] : memref<9x1x512xf32, #tpu.memory_space<vmem>>, vector<1x1x512xf32>
    %42 = vector.shape_cast %41 : vector<1x1x512xf32> to vector<1x512xf32>
    %43 = vector.broadcast %42 : vector<1x512xf32> to vector<4x512xf32>
    %44 = arith.mulf %40, %43 : vector<4x512xf32>
    %c5_30 = arith.constant 5 : index
    %c0_31 = arith.constant 0 : index
    %c0_32 = arith.constant 0 : index
    %45 = vector.load %arg2[%c5_30, %c0_31, %c0_32] : memref<9x8x4xf32, #tpu.memory_space<vmem>>, vector<1x8x4xf32>
    %46 = vector.shape_cast %45 : vector<1x8x4xf32> to vector<8x4xf32>
    %cst_33 = arith.constant dense<0.000000e+00> : vector<8x512xf32>
    %47 = tpu.matmul %46, %44, %cst_33 {dimension_numbers = #tpu.dot_dimension_numbers<[1], [0], [0], [1], [0, 0, 1, 1], [], []>} : vector<8x4xf32>, vector<4x512xf32>, vector<8x512xf32> -> vector<8x512xf32>
    %48 = arith.addf %39, %47 : vector<8x512xf32>
    %c497_i32 = arith.constant 497 : i32
    %49 = tpu.dynamic_rotate %0 by %c497_i32 dim 1 : vector<4x512xf32>, i32 -> vector<4x512xf32>
    %c6 = arith.constant 6 : index
    %c0_34 = arith.constant 0 : index
    %c0_35 = arith.constant 0 : index
    %50 = vector.load %arg4[%c6, %c0_34, %c0_35] : memref<9x1x512xf32, #tpu.memory_space<vmem>>, vector<1x1x512xf32>
    %51 = vector.shape_cast %50 : vector<1x1x512xf32> to vector<1x512xf32>
    %52 = vector.broadcast %51 : vector<1x512xf32> to vector<4x512xf32>
    %53 = arith.mulf %49, %52 : vector<4x512xf32>
    %c6_36 = arith.constant 6 : index
    %c0_37 = arith.constant 0 : index
    %c0_38 = arith.constant 0 : index
    %54 = vector.load %arg2[%c6_36, %c0_37, %c0_38] : memref<9x8x4xf32, #tpu.memory_space<vmem>>, vector<1x8x4xf32>
    %55 = vector.shape_cast %54 : vector<1x8x4xf32> to vector<8x4xf32>
    %cst_39 = arith.constant dense<0.000000e+00> : vector<8x512xf32>
    %56 = tpu.matmul %55, %53, %cst_39 {dimension_numbers = #tpu.dot_dimension_numbers<[1], [0], [0], [1], [0, 0, 1, 1], [], []>} : vector<8x4xf32>, vector<4x512xf32>, vector<8x512xf32> -> vector<8x512xf32>
    %57 = arith.addf %48, %56 : vector<8x512xf32>
    %c496_i32 = arith.constant 496 : i32
    %58 = tpu.dynamic_rotate %0 by %c496_i32 dim 1 : vector<4x512xf32>, i32 -> vector<4x512xf32>
    %c7 = arith.constant 7 : index
    %c0_40 = arith.constant 0 : index
    %c0_41 = arith.constant 0 : index
    %59 = vector.load %arg4[%c7, %c0_40, %c0_41] : memref<9x1x512xf32, #tpu.memory_space<vmem>>, vector<1x1x512xf32>
    %60 = vector.shape_cast %59 : vector<1x1x512xf32> to vector<1x512xf32>
    %61 = vector.broadcast %60 : vector<1x512xf32> to vector<4x512xf32>
    %62 = arith.mulf %58, %61 : vector<4x512xf32>
    %c7_42 = arith.constant 7 : index
    %c0_43 = arith.constant 0 : index
    %c0_44 = arith.constant 0 : index
    %63 = vector.load %arg2[%c7_42, %c0_43, %c0_44] : memref<9x8x4xf32, #tpu.memory_space<vmem>>, vector<1x8x4xf32>
    %64 = vector.shape_cast %63 : vector<1x8x4xf32> to vector<8x4xf32>
    %cst_45 = arith.constant dense<0.000000e+00> : vector<8x512xf32>
    %65 = tpu.matmul %64, %62, %cst_45 {dimension_numbers = #tpu.dot_dimension_numbers<[1], [0], [0], [1], [0, 0, 1, 1], [], []>} : vector<8x4xf32>, vector<4x512xf32>, vector<8x512xf32> -> vector<8x512xf32>
    %66 = arith.addf %57, %65 : vector<8x512xf32>
    %c495_i32 = arith.constant 495 : i32
    %67 = tpu.dynamic_rotate %0 by %c495_i32 dim 1 : vector<4x512xf32>, i32 -> vector<4x512xf32>
    %c8 = arith.constant 8 : index
    %c0_46 = arith.constant 0 : index
    %c0_47 = arith.constant 0 : index
    %68 = vector.load %arg4[%c8, %c0_46, %c0_47] : memref<9x1x512xf32, #tpu.memory_space<vmem>>, vector<1x1x512xf32>
    %69 = vector.shape_cast %68 : vector<1x1x512xf32> to vector<1x512xf32>
    %70 = vector.broadcast %69 : vector<1x512xf32> to vector<4x512xf32>
    %71 = arith.mulf %67, %70 : vector<4x512xf32>
    %c8_48 = arith.constant 8 : index
    %c0_49 = arith.constant 0 : index
    %c0_50 = arith.constant 0 : index
    %72 = vector.load %arg2[%c8_48, %c0_49, %c0_50] : memref<9x8x4xf32, #tpu.memory_space<vmem>>, vector<1x8x4xf32>
    %73 = vector.shape_cast %72 : vector<1x8x4xf32> to vector<8x4xf32>
    %cst_51 = arith.constant dense<0.000000e+00> : vector<8x512xf32>
    %74 = tpu.matmul %73, %71, %cst_51 {dimension_numbers = #tpu.dot_dimension_numbers<[1], [0], [0], [1], [0, 0, 1, 1], [], []>} : vector<8x4xf32>, vector<4x512xf32>, vector<8x512xf32> -> vector<8x512xf32>
    %75 = arith.addf %66, %74 : vector<8x512xf32>
    %c0_52 = arith.constant 0 : index
    %c0_53 = arith.constant 0 : index
    %76 = vector.load %arg3[%c0_52, %c0_53] : memref<8x1xf32, #tpu.memory_space<vmem>>, vector<8x1xf32>
    %77 = vector.broadcast %76 : vector<8x1xf32> to vector<8x512xf32>
    %78 = arith.addf %75, %77 : vector<8x512xf32>
    %cst_54 = arith.constant 0.000000e+00 : f32
    %79 = vector.broadcast %cst_54 : f32 to vector<8x512xf32>
    %80 = arith.maximumf %78, %79 : vector<8x512xf32>
    %81 = vector.extract_strided_slice %80 {offsets = [0, 0], sizes = [8, 256], strides = [1, 1]} : vector<8x512xf32> to vector<8x256xf32>
    %82 = vector.extract_strided_slice %80 {offsets = [0, 256], sizes = [8, 256], strides = [1, 1]} : vector<8x512xf32> to vector<8x256xf32>
    %83 = tpu.concatenate %81, %82 in 0 : vector<8x256xf32>, vector<8x256xf32> -> vector<16x256xf32>
    %c0_55 = arith.constant 0 : index
    %c0_56 = arith.constant 0 : index
    %84 = vector.load %arg5[%c0_55, %c0_56] : memref<256x1024xf32, #tpu.memory_space<vmem>>, vector<256x1024xf32>
    %cst_57 = arith.constant dense<0.000000e+00> : vector<16x1024xf32>
    %85 = tpu.matmul %83, %84, %cst_57 {dimension_numbers = #tpu.dot_dimension_numbers<[1], [0], [0], [1], [0, 0, 1, 1], [], []>} : vector<16x256xf32>, vector<256x1024xf32>, vector<16x1024xf32> -> vector<16x1024xf32>
    %c0_58 = arith.constant 0 : index
    %c0_59 = arith.constant 0 : index
    %86 = vector.load %arg6[%c0_58, %c0_59] : memref<16x1024xf32, #tpu.memory_space<vmem>>, vector<16x1024xf32>
    tpu.vector_store %arg6[%c0_58, %c0_59], %85 {strides = array<i32>} : memref<16x1024xf32, #tpu.memory_space<vmem>>, vector<16x1024xf32>,
    return
  }
  func.func @transform_0(%arg0: i32) -> (i32, i32) {
    %c0_i32 = arith.constant 0 : i32
    %c0_i32_0 = arith.constant 0 : i32
    return %c0_i32, %arg0 : i32, i32
  }
  func.func @transform_1(%arg0: i32) -> (i32, i32, i32) {
    %c0_i32 = arith.constant 0 : i32
    %c0_i32_0 = arith.constant 0 : i32
    %c0_i32_1 = arith.constant 0 : i32
    %c0_i32_2 = arith.constant 0 : i32
    return %c0_i32, %c0_i32_0, %c0_i32_1 : i32, i32, i32
  }
  func.func @transform_2(%arg0: i32) -> (i32, i32) {
    %c0_i32 = arith.constant 0 : i32
    %c0_i32_0 = arith.constant 0 : i32
    %c0_i32_1 = arith.constant 0 : i32
    return %c0_i32, %c0_i32_0 : i32, i32
  }
  func.func @transform_3(%arg0: i32) -> (i32, i32, i32) {
    %c0_i32 = arith.constant 0 : i32
    %c0_i32_0 = arith.constant 0 : i32
    %c0_i32_1 = arith.constant 0 : i32
    %c0_i32_2 = arith.constant 0 : i32
    return %c0_i32, %c0_i32_0, %c0_i32_1 : i32, i32, i32
  }
  func.func @transform_4(%arg0: i32) -> (i32, i32) {
    %c0_i32 = arith.constant 0 : i32
    %c0_i32_0 = arith.constant 0 : i32
    %c0_i32_1 = arith.constant 0 : i32
    return %c0_i32, %c0_i32_0 : i32, i32
  }
  func.func @transform_5(%arg0: i32) -> (i32, i32) {
    %c0_i32 = arith.constant 0 : i32
    %c0_i32_0 = arith.constant 0 : i32
    return %arg0, %c0_i32 : i32, i32
  }
}

</mosaic_0001>

<llo_original>
// kernel: tpu_custom_call.1
$region0: #{tpu_custom_call.1}
  #allocation0 [shape = 'u32[]', space=smem, size = 0x4, offset = 0x4, fixed_abs, tag = 'smem constant byte address 0x4 - core index']
  #allocation1 [shape = 'u32[144,128]{1,0:T(1,128)}', space=vmem, size = 0x12000, scoped, tag = 'internal scratch']
  %s0 = inlined_call_operand.vmem [shape: f32[4,1024], index: 0, kind: input, shape index: {}]
  %s1 = inlined_call_operand.vmem [shape: f32[9,8,4], index: 1, kind: input, shape index: {}]
  %s2 = inlined_call_operand.vmem [shape: f32[8,1], index: 2, kind: input, shape index: {}]
  %s3 = inlined_call_operand.vmem [shape: f32[9,1,512], index: 3, kind: input, shape index: {}]
  %s4 = inlined_call_operand.hbm [shape: f32[256,1024], index: 4, kind: input, shape index: {}]
  %s5 = inlined_call_operand.hbm [shape: f32[32,1024], index: 5, kind: output, shape index: {}]
  %s6 = sld [smem:[#allocation0]]
  $region57: #{tpu_custom_call.1} parent=0
    _
  %s8 = ssub.s32 1, %s6
  %s9 = scalar_select 0, %s8, %s6
  $region1: #{tpu_custom_call.1} parent=0
    #allocation2 [shape = 'u8[1048576]{0}', space=vmem, size = 0x100000, scoped, tag = 'input window, operand 4, single buffered']
    #allocation3 [shape = 's32[2]{0}', space=sflag, size = 0x8, scoped, tag = 'scoped memory for tpu_custom_call.1']
    #allocation4 [shape = 's32[2]{0}', space=sflag, size = 0x8, scoped, tag = 'scoped memory for tpu_custom_call.1']
    #allocation5 [shape = 'u8[131072]{0}', space=vmem, size = 0x20000, scoped, tag = 'output window, operand 0']
    %10 = vsyncpa [#allocation3], 0
    %11 = vsyncpa [#allocation4], 0
    %s12 = scalar_lea.sflag [#allocation4], 1
    %13 = vsyncpa %s12, 0
    loop: start=0, step=1, limit=4
    $region2: #{tpu_custom_call.1} parent=1 // loop_pre_header
      _
    $region3: #{tpu_custom_call.1} parent=1 // loop_header
      %s15 = sphi 0, %s19
      %p16 = scmp.ge.s32.totalorder %s15, 4
      %s25 = sphi 0, %s27
      %s28 = sphi 0, %s25
      %s29 = sphi 0, %s28
      %s45 = sphi 0, %s29
      %s49 = sphi 0, %s49
      %s51 = sphi 0, %s49
      %s52 = sphi 0, %s51
      %s66 = sphi 0, %s52
      %s70 = sphi 0, %s70
      %s72 = sphi 0, %s70
      %s73 = sphi 0, %s72
      %s87 = sphi 0, %s73
      %s91 = sphi 0, %s91
      %s93 = sphi 0, %s91
      %s94 = sphi 0, %s93
      %s108 = sphi 0, %s94
      %s112 = sphi 0, %s112
      %s114 = sphi 0, %s112
      %s115 = sphi 0, %s114
      %s129 = sphi 0, %s115
      %s135 = sphi 0, %s137
      %s138 = sphi 0, %s135
      %s139 = sphi 0, %s138
      %s155 = sphi 0, %s139
    $region4: #{tpu_custom_call.1} parent=1 // loop_header_branch
      %18 = sbr.rel (%p16) target = $region8
    $region5: #{tpu_custom_call.1} parent=1 // loop_body
      %s20 = ssub.s32 %s15, 1
      %s21 = ssub.s32 %s15, 2
      %s22 = sadd.s32 %s15, 1
      %s23 = ssub.s32 %s15, %s22
      %p24 = scmp.eq.s32.totalorder %s23, 0
      %s26 = sadd.s32 %s25, 1
      %s27 = scalar_select %p24, %s25, %s26
      %p30 = pneg %p24
      %p31 = scmp.eq.s32.totalorder %s15, 1
      %p32 = por %p30, %p31
      %p33 = scmp.ne.s32.totalorder %s25, %s28
      %p34 = scmp.eq.s32.totalorder %s15, 0
      %p35 = por %p33, %p34
      %p36 = scmp.ne.s32.totalorder %s25, %s28
      %p37 = scmp.eq.s32.totalorder %s20, 1
      %p38 = por %p36, %p37
      %p39 = scmp.ne.s32.totalorder %s28, %s29
      %p40 = scmp.eq.s32.totalorder %s20, 0
      %p41 = por %p39, %p40
      %p42 = scmp.ne.s32.totalorder %s28, %s29
      %p43 = scmp.eq.s32.totalorder %s21, 1
      %p44 = por %p42, %p43
      %p46 = scmp.ne.s32.totalorder %s29, %s45
      %p47 = scmp.eq.s32.totalorder %s21, 0
      %p48 = por %p46, %p47
      %s50 = sadd.s32 %s49, 1
      %p53 = scmp.eq.s32.totalorder %s15, 1
      %p54 = scmp.ne.s32.totalorder %s49, %s51
      %p55 = scmp.eq.s32.totalorder %s15, 0
      %p56 = por %p54, %p55
      %p57 = scmp.ne.s32.totalorder %s49, %s51
      %p58 = scmp.eq.s32.totalorder %s20, 1
      %p59 = por %p57, %p58
      %p60 = scmp.ne.s32.totalorder %s51, %s52
      %p61 = scmp.eq.s32.totalorder %s20, 0
      %p62 = por %p60, %p61
      %p63 = scmp.ne.s32.totalorder %s51, %s52
      %p64 = scmp.eq.s32.totalorder %s21, 1
      %p65 = por %p63, %p64
      %p67 = scmp.ne.s32.totalorder %s52, %s66
      %p68 = scmp.eq.s32.totalorder %s21, 0
      %p69 = por %p67, %p68
      %s71 = sadd.s32 %s70, 1
      %p74 = scmp.eq.s32.totalorder %s15, 1
      %p75 = scmp.ne.s32.totalorder %s70, %s72
      %p76 = scmp.eq.s32.totalorder %s15, 0
      %p77 = por %p75, %p76
      %p78 = scmp.ne.s32.totalorder %s70, %s72
      %p79 = scmp.eq.s32.totalorder %s20, 1
      %p80 = por %p78, %p79
      %p81 = scmp.ne.s32.totalorder %s72, %s73
      %p82 = scmp.eq.s32.totalorder %s20, 0
      %p83 = por %p81, %p82
      %p84 = scmp.ne.s32.totalorder %s72, %s73
      %p85 = scmp.eq.s32.totalorder %s21, 1
      %p86 = por %p84, %p85
      %p88 = scmp.ne.s32.totalorder %s73, %s87
      %p89 = scmp.eq.s32.totalorder %s21, 0
      %p90 = por %p88, %p89
      %s92 = sadd.s32 %s91, 1
      %p95 = scmp.eq.s32.totalorder %s15, 1
      %p96 = scmp.ne.s32.totalorder %s91, %s93
      %p97 = scmp.eq.s32.totalorder %s15, 0
      %p98 = por %p96, %p97
      %p99 = scmp.ne.s32.totalorder %s91, %s93
      %p100 = scmp.eq.s32.totalorder %s20, 1
      %p101 = por %p99, %p100
      %p102 = scmp.ne.s32.totalorder %s93, %s94
      %p103 = scmp.eq.s32.totalorder %s20, 0
      %p104 = por %p102, %p103
      %p105 = scmp.ne.s32.totalorder %s93, %s94
      %p106 = scmp.eq.s32.totalorder %s21, 1
      %p107 = por %p105, %p106
      %p109 = scmp.ne.s32.totalorder %s94, %s108
      %p110 = scmp.eq.s32.totalorder %s21, 0
      %p111 = por %p109, %p110
      %s113 = sadd.s32 %s112, 1
      %p116 = scmp.eq.s32.totalorder %s15, 1
      %p117 = scmp.ne.s32.totalorder %s112, %s114
      %p118 = scmp.eq.s32.totalorder %s15, 0
      %p119 = por %p117, %p118
      %p120 = scmp.ne.s32.totalorder %s112, %s114
      %p121 = scmp.eq.s32.totalorder %s20, 1
      %p122 = por %p120, %p121
      %p123 = scmp.ne.s32.totalorder %s114, %s115
      %p124 = scmp.eq.s32.totalorder %s20, 0
      %p125 = por %p123, %p124
      %p126 = scmp.ne.s32.totalorder %s114, %s115
      %p127 = scmp.eq.s32.totalorder %s21, 1
      %p128 = por %p126, %p127
      %p130 = scmp.ne.s32.totalorder %s115, %s129
      %p131 = scmp.eq.s32.totalorder %s21, 0
      %p132 = por %p130, %p131
      %s133 = ssub.s32 %s15, %s22
      %p134 = scmp.eq.s32.totalorder %s133, 0
      %s136 = sadd.s32 %s135, 1
      %s137 = scalar_select %p134, %s135, %s136
      %p140 = pneg %p134
      %p141 = scmp.eq.s32.totalorder %s15, 1
      %p142 = por %p140, %p141
      %p143 = scmp.ne.s32.totalorder %s135, %s138
      %p144 = scmp.eq.s32.totalorder %s15, 0
      %p145 = por %p143, %p144
      %p146 = scmp.ne.s32.totalorder %s135, %s138
      %p147 = scmp.eq.s32.totalorder %s20, 1
      %p148 = por %p146, %p147
      %p149 = scmp.ne.s32.totalorder %s138, %s139
      %p150 = scmp.eq.s32.totalorder %s20, 0
      %p151 = por %p149, %p150
      %p152 = scmp.ne.s32.totalorder %s138, %s139
      %p153 = scmp.eq.s32.totalorder %s21, 1
      %p154 = por %p152, %p153
      %p156 = scmp.ne.s32.totalorder %s139, %s155
      %p157 = scmp.eq.s32.totalorder %s21, 0
      %p158 = por %p156, %p157
      %p159 = scmp.le.s32.totalorder 1, %s15
      %p160 = scmp.lt.s32.totalorder %s15, 3
      %p161 = pnand %p159, %p160
      %p162 = pneg %p161
      // Predicated region
      $region9: #{tpu_custom_call.1} parent=5 // pred_check
        _
      $region10: #{tpu_custom_call.1} parent=5 // pred_check_branch
        %164 = sbr.rel (%p161) target = $region12
      $region11: #{tpu_custom_call.1} parent=5 // pred_region
        %s165 = ssub.s32 %s15, 1
        // Predicated region
        $region13: #{tpu_custom_call.1} parent=11 // pred_check
          %p166 = pneg %p62
        $region14: #{tpu_custom_call.1} parent=11 // pred_check_branch
          %168 = sbr.rel (%p166) target = $region16
        $region15: #{tpu_custom_call.1} parent=11 // pred_region
          _
        $region16: #{tpu_custom_call.1} parent=11 // pred_fallthru
          _
        // Predicated region
        $region17: #{tpu_custom_call.1} parent=11 // pred_check
          %p169 = pneg %p83
        $region18: #{tpu_custom_call.1} parent=11 // pred_check_branch
          %171 = sbr.rel (%p169) target = $region20
        $region19: #{tpu_custom_call.1} parent=11 // pred_region
          _
        $region20: #{tpu_custom_call.1} parent=11 // pred_fallthru
          _
        // Predicated region
        $region21: #{tpu_custom_call.1} parent=11 // pred_check
          %p172 = pneg %p104
        $region22: #{tpu_custom_call.1} parent=11 // pred_check_branch
          %174 = sbr.rel (%p172) target = $region24
        $region23: #{tpu_custom_call.1} parent=11 // pred_region
          _
        $region24: #{tpu_custom_call.1} parent=11 // pred_fallthru
          _
        // Predicated region
        $region25: #{tpu_custom_call.1} parent=11 // pred_check
          %p175 = pneg %p125
        $region26: #{tpu_custom_call.1} parent=11 // pred_check_branch
          %177 = sbr.rel (%p175) target = $region28
        $region27: #{tpu_custom_call.1} parent=11 // pred_region
          %s179 = ssub.s32 32768, 32768
          %180 = vsyncadd [#allocation3], %s179
          %s181 = sshll.u32 [#allocation2], 4
          %s182 = int_to_ptr.vmem [resolvable:$true] %s181
          %187 = dma.hbm_to_vmem [thread:$0]  %s4, 32768, %s182, [#allocation3], 1024, 1024, 64
        $region28: #{tpu_custom_call.1} parent=11 // pred_fallthru
          _
      $region12: #{tpu_custom_call.1} parent=5 // pred_fallthru
        _
      %p188 = scmp.lt.s32.totalorder %s15, 2
      // Predicated region
      $region29: #{tpu_custom_call.1} parent=5 // pred_check
        %p189 = pneg %p188
      $region30: #{tpu_custom_call.1} parent=5 // pred_check_branch
        %191 = sbr.rel (%p189) target = $region32
      $region31: #{tpu_custom_call.1} parent=5 // pred_region
        // Predicated region
        $region33: #{tpu_custom_call.1} parent=31 // pred_check
          %p192 = pneg %p35
        $region34: #{tpu_custom_call.1} parent=31 // pred_check_branch
          %194 = sbr.rel (%p192) target = $region36
        $region35: #{tpu_custom_call.1} parent=31 // pred_region
          %s195 = smul.u32 4, %s15
          %p196 = scmp.lt.s32.totalorder %s195, 7
          %s197 = scalar_select %p196, %s195, 7
          %s198 = smul.addr %s197, 4
          %s199 = scalar_lea.vmem %s0, %s198
          %s200 = smul.u32 4, %s15
        $region36: #{tpu_custom_call.1} parent=31 // pred_fallthru
          _
      $region32: #{tpu_custom_call.1} parent=5 // pred_fallthru
        _
      %p201 = scmp.le.s32.totalorder 1, %s15
      %p202 = scmp.lt.s32.totalorder %s15, 3
      %p203 = pnand %p201, %p202
      %p204 = pneg %p203
      // Predicated region
      $region37: #{tpu_custom_call.1} parent=5 // pred_check
        _
      $region38: #{tpu_custom_call.1} parent=5 // pred_check_branch
        %206 = sbr.rel (%p203) target = $region40
      $region39: #{tpu_custom_call.1} parent=5 // pred_region
        %s207 = ssub.s32 %s15, 1
        // Predicated region
        $region41: #{tpu_custom_call.1} parent=39 // pred_check
          %p208 = pneg %p125
        $region42: #{tpu_custom_call.1} parent=39 // pred_check_branch
          %210 = sbr.rel (%p208) target = $region44
        $region43: #{tpu_custom_call.1} parent=39 // pred_region
          %211 = dma.done [#allocation3], 32768
        $region44: #{tpu_custom_call.1} parent=39 // pred_fallthru
          _
        %s212 = smul.u32 4, %s20
        %p213 = scmp.lt.s32.totalorder %s212, 7
        %s214 = scalar_select %p213, %s212, 7
        %s215 = smul.addr %s214, 4
        %s216 = scalar_lea.vmem %s0, %s215
        %p217 = pneg %p41
        %p218 = pneg %p38
        %p219 = pneg %p62
        %p220 = pneg %p59
        %p221 = pneg %p83
        %p222 = pneg %p80
        %p223 = pneg %p104
        %p224 = pneg %p101
        %p225 = pneg %p125
        %p226 = pneg %p122
        %p227 = pneg %p151
        %p228 = pneg %p148
        %s229 = sand.u32 %s138, 1
        %s230 = scalar_lea.sflag [#allocation4], %s229
        %s231 = sand.u32 %s138, 1
        %s232 = smul.addr %s231, 128
        %s233 = scalar_lea.vmem [#allocation5], %s232
        %s234 = smul.u32 4, %s20
        %p235 = scmp.lt.s32.totalorder %s234, 7
        %s236 = scalar_select %p235, %s234, 7
        %s237 = smul.addr %s236, 4
        %s238 = scalar_lea.vmem %s0, %s237
        %s239 = smul.u32 4, %s20
        %s240 = smul.u32 2, %s20
        %v241 = vld [vmem:[%s238] sm:$0xff]
        %v242 = vld [vmem:[%s238 + $0x8] sm:$0xff]
        %v245 = vcombine.high %v241, %v241
        %v246 = vcombine.high %v242, %v242
        %249 = vrot.lane.b32.xlu0 %v241, 17
        %v250 = vpop.permute.xlu0 %249
        %251 = vrot.lane.b32.xlu0 %v245, 17
        %v252 = vpop.permute.xlu0 %251
        %253 = vrot.lane.b32.xlu0 %v242, 17
        %v254 = vpop.permute.xlu0 %253
        %255 = vrot.lane.b32.xlu0 %v246, 17
        %v256 = vpop.permute.xlu0 %255
        %v257 = vlaneseq
        %v258 = vand.u32 %v257, 127
        %vm259 = vcmp.lt.s32.totalorder %v258, 17
        %v260 = vsel %vm259, %v254, %v256
        %v261 = vsel %vm259, %v252, %v254
        %v262 = vsel %vm259, %v250, %v252
        %v263 = vsel %vm259, %v256, %v250
        %v264 = vld [vmem:[%s3] sm:$0xf]
        %v266 = vlaneseq
        %v267 = vshrl.u32 %v266, 7
        %v268 = vsub.s32 0, %v267
        %v269 = vrot.slane %v264, %v268
        %v270 = vlaneseq
        %v271 = vshrl.u32 %v270, 7
        %v272 = vsub.s32 1, %v271
        %v273 = vrot.slane %v264, %v272
        %v274 = vlaneseq
        %v275 = vshrl.u32 %v274, 7
        %v276 = vsub.s32 2, %v275
        %v277 = vrot.slane %v264, %v276
        %v278 = vlaneseq
        %v279 = vshrl.u32 %v278, 7
        %v280 = vsub.s32 3, %v279
        %v281 = vrot.slane %v264, %v280
        %v286 = vmul.f32 %v263, %v269
        %v287 = vmul.f32 %v262, %v273
        %v288 = vmul.f32 %v261, %v277
        %v289 = vmul.f32 %v260, %v281
        %v290 = vld [vmem:[%s1] sm:$0xff]
        %291 = vrot.lane.b32.xlu0 %v241, 16
        %v292 = vpop.permute.xlu0 %291
        %293 = vrot.lane.b32.xlu0 %v245, 16
        %v294 = vpop.permute.xlu0 %293
        %295 = vrot.lane.b32.xlu0 %v242, 16
        %v296 = vpop.permute.xlu0 %295
        %297 = vrot.lane.b32.xlu0 %v246, 16
        %v298 = vpop.permute.xlu0 %297
        %vm299 = vcmp.lt.s32.totalorder %v258, 16
        %v300 = vsel %vm299, %v296, %v298
        %v301 = vsel %vm299, %v294, %v296
        %v302 = vsel %vm299, %v292, %v294
        %v303 = vsel %vm299, %v298, %v292
        %s304 = scalar_lea.vmem %s3, 4
        %v305 = vld [vmem:[%s304] sm:$0xf]
        %v307 = vlaneseq
        %v308 = vshrl.u32 %v307, 7
        %v309 = vsub.s32 0, %v308
        %v310 = vrot.slane %v305, %v309
        %v311 = vlaneseq
        %v312 = vshrl.u32 %v311, 7
        %v313 = vsub.s32 1, %v312
        %v314 = vrot.slane %v305, %v313
        %v315 = vlaneseq
        %v316 = vshrl.u32 %v315, 7
        %v317 = vsub.s32 2, %v316
        %v318 = vrot.slane %v305, %v317
        %v319 = vlaneseq
        %v320 = vshrl.u32 %v319, 7
        %v321 = vsub.s32 3, %v320
        %v322 = vrot.slane %v305, %v321
        %v327 = vmul.f32 %v303, %v310
        %v328 = vmul.f32 %v302, %v314
        %v329 = vmul.f32 %v301, %v318
        %v330 = vmul.f32 %v300, %v322
        %s331 = scalar_lea.vmem %s1, 8
        %v332 = vld [vmem:[%s331] sm:$0xff]
        %vm333 = vcmask 31744
        %v335 = vsel %vm333, %v332, 0
        %vm337 = vcmask 1043456
        %v339 = vsel %vm337, %v327, 0
        %v342 = vsel %vm337, %v328, 0
        %v345 = vsel %vm337, %v329, 0
        %v348 = vsel %vm337, %v330, 0
        %350 = vmatprep.subr.mxu0 %v342
        %351 = vmatpush1.msra.mxu0 %v339
        %352 = vmatprep.subr.mxu0 0.0
        %353 = vmatpush1.msra.mxu0 0.0
        %354 = vmatprep.subr.mxu0 0.0
        %355 = vmatpush1.msra.mxu0 0.0
        %356 = vmatprep.subr.mxu0 0.0
        %357 = vmatpush1.msra.mxu0 0.0
        %358 = vmatprep.subr.mxu0 0.0
        %359 = vmatpush1.msra.mxu0 0.0
        %360 = vmatprep.subr.mxu0 0.0
        %361 = vmatpush1.msra.mxu0 0.0
        %362 = vmatprep.subr.mxu0 0.0
        %363 = vmatpush1.msra.mxu0 0.0
        %364 = vmatprep.subr.mxu0 0.0
        %365 = vmatpush1.msra.mxu0 0.0
        %366 = vmatprep.subr.mxu0 0.0
        %367 = vmatpush1.msra.mxu0 0.0
        %368 = vmatprep.subr.mxu0 0.0
        %369 = vmatpush1.msra.mxu0 0.0
        %370 = vmatprep.subr.mxu0 0.0
        %371 = vmatpush1.msra.mxu0 0.0
        %372 = vmatprep.subr.mxu0 0.0
        %373 = vmatpush1.msra.mxu0 0.0
        %374 = vmatprep.subr.mxu0 0.0
        %375 = vmatpush1.msra.mxu0 0.0
        %376 = vmatprep.subr.mxu0 0.0
        %377 = vmatpush1.msra.mxu0 0.0
        %378 = vmatprep.subr.mxu0 0.0
        %379 = vmatpush1.msra.mxu0 0.0
        %380 = vmatprep.subr.mxu0 0.0
        %381 = vmatpush1.msra.mxu0 0.0
        %382 = vmatprep.subr.mxu0 0.0
        %383 = vmatpush1.msra.mxu0 0.0
        %384 = vmatprep.subr.mxu0 0.0
        %385 = vmatpush1.msra.mxu0 0.0
        %386 = vmatprep.subr.mxu0 0.0
        %387 = vmatpush1.msra.mxu0 0.0
        %388 = vmatprep.subr.mxu0 0.0
        %389 = vmatpush1.msra.mxu0 0.0
        %390 = vmatprep.subr.mxu0 0.0
        %391 = vmatpush1.msra.mxu0 0.0
        %392 = vmatprep.subr.mxu0 0.0
        %393 = vmatpush1.msra.mxu0 0.0
        %394 = vmatprep.subr.mxu0 0.0
        %395 = vmatpush1.msra.mxu0 0.0
        %396 = vmatprep.subr.mxu0 0.0
        %397 = vmatpush1.msra.mxu0 0.0
        %398 = vmatprep.subr.mxu0 0.0
        %399 = vmatpush1.msra.mxu0 0.0
        %400 = vmatprep.subr.mxu0 0.0
        %401 = vmatpush1.msra.mxu0 0.0
        %402 = vmatprep.subr.mxu0 0.0
        %403 = vmatpush1.msra.mxu0 0.0
        %404 = vmatprep.subr.mxu0 0.0
        %405 = vmatpush1.msra.mxu0 0.0
        %406 = vmatprep.subr.mxu0 0.0
        %407 = vmatpush1.msra.mxu0 0.0
        %408 = vmatprep.subr.mxu0 0.0
        %409 = vmatpush1.msra.mxu0 0.0
        %410 = vmatprep.subr.mxu0 0.0
        %411 = vmatpush1.msra.mxu0 0.0
        %412 = vmatprep.subr.mxu0 0.0
        %413 = vmatpush1.msra.mxu0 0.0
        %414 = vmatprep.mubr.f32.mxu0 0.0
        %415 = vmatmul.mubr.f32.gmra.mrb[0].mxu0 %v335
        %v416 = vpop.f32.mrb[0].mxu0
        %v417 = vadd.f32 0.0, %v416
        %v418 = vpop.f32.mrb[0].mxu0
        %v419 = vadd.f32 0.0, %v418
        %420 = vdwg.mxu0
        %421 = vmatprep.subr.mxu0 %v348
        %422 = vmatpush1.msra.mxu0 %v345
        %423 = vmatprep.subr.mxu0 0.0
        %424 = vmatpush1.msra.mxu0 0.0
        %425 = vmatprep.subr.mxu0 0.0
        %426 = vmatpush1.msra.mxu0 0.0
        %427 = vmatprep.subr.mxu0 0.0
        %428 = vmatpush1.msra.mxu0 0.0
        %429 = vmatprep.subr.mxu0 0.0
        %430 = vmatpush1.msra.mxu0 0.0
        %431 = vmatprep.subr.mxu0 0.0
        %432 = vmatpush1.msra.mxu0 0.0
        %433 = vmatprep.subr.mxu0 0.0
        %434 = vmatpush1.msra.mxu0 0.0
        %435 = vmatprep.subr.mxu0 0.0
        %436 = vmatpush1.msra.mxu0 0.0
        %437 = vmatprep.subr.mxu0 0.0
        %438 = vmatpush1.msra.mxu0 0.0
        %439 = vmatprep.subr.mxu0 0.0
        %440 = vmatpush1.msra.mxu0 0.0
        %441 = vmatprep.subr.mxu0 0.0
        %442 = vmatpush1.msra.mxu0 0.0
        %443 = vmatprep.subr.mxu0 0.0
        %444 = vmatpush1.msra.mxu0 0.0
        %445 = vmatprep.subr.mxu0 0.0
        %446 = vmatpush1.msra.mxu0 0.0
        %447 = vmatprep.subr.mxu0 0.0
        %448 = vmatpush1.msra.mxu0 0.0
        %449 = vmatprep.subr.mxu0 0.0
        %450 = vmatpush1.msra.mxu0 0.0
        %451 = vmatprep.subr.mxu0 0.0
        %452 = vmatpush1.msra.mxu0 0.0
        %453 = vmatprep.subr.mxu0 0.0
        %454 = vmatpush1.msra.mxu0 0.0
        %455 = vmatprep.subr.mxu0 0.0
        %456 = vmatpush1.msra.mxu0 0.0
        %457 = vmatprep.subr.mxu0 0.0
        %458 = vmatpush1.msra.mxu0 0.0
        %459 = vmatprep.subr.mxu0 0.0
        %460 = vmatpush1.msra.mxu0 0.0
        %461 = vmatprep.subr.mxu0 0.0
        %462 = vmatpush1.msra.mxu0 0.0
        %463 = vmatprep.subr.mxu0 0.0
        %464 = vmatpush1.msra.mxu0 0.0
        %465 = vmatprep.subr.mxu0 0.0
        %466 = vmatpush1.msra.mxu0 0.0
        %467 = vmatprep.subr.mxu0 0.0
        %468 = vmatpush1.msra.mxu0 0.0
        %469 = vmatprep.subr.mxu0 0.0
        %470 = vmatpush1.msra.mxu0 0.0
        %471 = vmatprep.subr.mxu0 0.0
        %472 = vmatpush1.msra.mxu0 0.0
        %473 = vmatprep.subr.mxu0 0.0
        %474 = vmatpush1.msra.mxu0 0.0
        %475 = vmatprep.subr.mxu0 0.0
        %476 = vmatpush1.msra.mxu0 0.0
        %477 = vmatprep.subr.mxu0 0.0
        %478 = vmatpush1.msra.mxu0 0.0
        %479 = vmatprep.subr.mxu0 0.0
        %480 = vmatpush1.msra.mxu0 0.0
        %481 = vmatprep.subr.mxu0 0.0
        %482 = vmatpush1.msra.mxu0 0.0
        %483 = vmatprep.subr.mxu0 0.0
        %484 = vmatpush1.msra.mxu0 0.0
        %485 = vmatprep.mubr.f32.mxu0 0.0
        %486 = vmatmul.mubr.f32.gmra.mrb[0].mxu0 %v335
        %v487 = vpop.f32.mrb[0].mxu0
        %v488 = vadd.f32 0.0, %v487
        %v489 = vpop.f32.mrb[0].mxu0
        %v490 = vadd.f32 0.0, %v489
        %491 = vdwg.mxu0
        %v493 = vsel %vm333, %v290, 0
        %v496 = vsel %vm337, %v286, 0
        %v499 = vsel %vm337, %v287, 0
        %v502 = vsel %vm337, %v288, 0
        %v505 = vsel %vm337, %v289, 0
        %507 = vmatprep.subr.mxu0 %v499
        %508 = vmatpush1.msra.mxu0 %v496
        %509 = vmatprep.subr.mxu0 0.0
        %510 = vmatpush1.msra.mxu0 0.0
        %511 = vmatprep.subr.mxu0 0.0
        %512 = vmatpush1.msra.mxu0 0.0
        %513 = vmatprep.subr.mxu0 0.0
        %514 = vmatpush1.msra.mxu0 0.0
        %515 = vmatprep.subr.mxu0 0.0
        %516 = vmatpush1.msra.mxu0 0.0
        %517 = vmatprep.subr.mxu0 0.0
        %518 = vmatpush1.msra.mxu0 0.0
        %519 = vmatprep.subr.mxu0 0.0
        %520 = vmatpush1.msra.mxu0 0.0
        %521 = vmatprep.subr.mxu0 0.0
        %522 = vmatpush1.msra.mxu0 0.0
        %523 = vmatprep.subr.mxu0 0.0
        %524 = vmatpush1.msra.mxu0 0.0
        %525 = vmatprep.subr.mxu0 0.0
        %526 = vmatpush1.msra.mxu0 0.0
        %527 = vmatprep.subr.mxu0 0.0
        %528 = vmatpush1.msra.mxu0 0.0
        %529 = vmatprep.subr.mxu0 0.0
        %530 = vmatpush1.msra.mxu0 0.0
        %531 = vmatprep.subr.mxu0 0.0
        %532 = vmatpush1.msra.mxu0 0.0
        %533 = vmatprep.subr.mxu0 0.0
        %534 = vmatpush1.msra.mxu0 0.0
        %535 = vmatprep.subr.mxu0 0.0
        %536 = vmatpush1.msra.mxu0 0.0
        %537 = vmatprep.subr.mxu0 0.0
        %538 = vmatpush1.msra.mxu0 0.0
        %539 = vmatprep.subr.mxu0 0.0
        %540 = vmatpush1.msra.mxu0 0.0
        %541 = vmatprep.subr.mxu0 0.0
        %542 = vmatpush1.msra.mxu0 0.0
        %543 = vmatprep.subr.mxu0 0.0
        %544 = vmatpush1.msra.mxu0 0.0
        %545 = vmatprep.subr.mxu0 0.0
        %546 = vmatpush1.msra.mxu0 0.0
        %547 = vmatprep.subr.mxu0 0.0
        %548 = vmatpush1.msra.mxu0 0.0
        %549 = vmatprep.subr.mxu0 0.0
        %550 = vmatpush1.msra.mxu0 0.0
        %551 = vmatprep.subr.mxu0 0.0
        %552 = vmatpush1.msra.mxu0 0.0
        %553 = vmatprep.subr.mxu0 0.0
        %554 = vmatpush1.msra.mxu0 0.0
        %555 = vmatprep.subr.mxu0 0.0
        %556 = vmatpush1.msra.mxu0 0.0
        %557 = vmatprep.subr.mxu0 0.0
        %558 = vmatpush1.msra.mxu0 0.0
        %559 = vmatprep.subr.mxu0 0.0
        %560 = vmatpush1.msra.mxu0 0.0
        %561 = vmatprep.subr.mxu0 0.0
        %562 = vmatpush1.msra.mxu0 0.0
        %563 = vmatprep.subr.mxu0 0.0
        %564 = vmatpush1.msra.mxu0 0.0
        %565 = vmatprep.subr.mxu0 0.0
        %566 = vmatpush1.msra.mxu0 0.0
        %567 = vmatprep.subr.mxu0 0.0
        %568 = vmatpush1.msra.mxu0 0.0
        %569 = vmatprep.subr.mxu0 0.0
        %570 = vmatpush1.msra.mxu0 0.0
        %571 = vmatprep.mubr.f32.mxu0 0.0
        %572 = vmatmul.mubr.f32.gmra.mrb[0].mxu0 %v493
        %v573 = vpop.f32.mrb[0].mxu0
        %v574 = vadd.f32 %v417, %v573
        %v575 = vpop.f32.mrb[0].mxu0
        %v576 = vadd.f32 %v419, %v575
        %577 = vdwg.mxu0
        %578 = vmatprep.subr.mxu0 %v505
        %579 = vmatpush1.msra.mxu0 %v502
        %580 = vmatprep.subr.mxu0 0.0
        %581 = vmatpush1.msra.mxu0 0.0
        %582 = vmatprep.subr.mxu0 0.0
        %583 = vmatpush1.msra.mxu0 0.0
        %584 = vmatprep.subr.mxu0 0.0
        %585 = vmatpush1.msra.mxu0 0.0
        %586 = vmatprep.subr.mxu0 0.0
        %587 = vmatpush1.msra.mxu0 0.0
        %588 = vmatprep.subr.mxu0 0.0
        %589 = vmatpush1.msra.mxu0 0.0
        %590 = vmatprep.subr.mxu0 0.0
        %591 = vmatpush1.msra.mxu0 0.0
        %592 = vmatprep.subr.mxu0 0.0
        %593 = vmatpush1.msra.mxu0 0.0
        %594 = vmatprep.subr.mxu0 0.0
        %595 = vmatpush1.msra.mxu0 0.0
        %596 = vmatprep.subr.mxu0 0.0
        %597 = vmatpush1.msra.mxu0 0.0
        %598 = vmatprep.subr.mxu0 0.0
        %599 = vmatpush1.msra.mxu0 0.0
        %600 = vmatprep.subr.mxu0 0.0
        %601 = vmatpush1.msra.mxu0 0.0
        %602 = vmatprep.subr.mxu0 0.0
        %603 = vmatpush1.msra.mxu0 0.0
        %604 = vmatprep.subr.mxu0 0.0
        %605 = vmatpush1.msra.mxu0 0.0
        %606 = vmatprep.subr.mxu0 0.0
        %607 = vmatpush1.msra.mxu0 0.0
        %608 = vmatprep.subr.mxu0 0.0
        %609 = vmatpush1.msra.mxu0 0.0
        %610 = vmatprep.subr.mxu0 0.0
        %611 = vmatpush1.msra.mxu0 0.0
        %612 = vmatprep.subr.mxu0 0.0
        %613 = vmatpush1.msra.mxu0 0.0
        %614 = vmatprep.subr.mxu0 0.0
        %615 = vmatpush1.msra.mxu0 0.0
        %616 = vmatprep.subr.mxu0 0.0
        %617 = vmatpush1.msra.mxu0 0.0
        %618 = vmatprep.subr.mxu0 0.0
        %619 = vmatpush1.msra.mxu0 0.0
        %620 = vmatprep.subr.mxu0 0.0
        %621 = vmatpush1.msra.mxu0 0.0
        %622 = vmatprep.subr.mxu0 0.0
        %623 = vmatpush1.msra.mxu0 0.0
        %624 = vmatprep.subr.mxu0 0.0
        %625 = vmatpush1.msra.mxu0 0.0
        %626 = vmatprep.subr.mxu0 0.0
        %627 = vmatpush1.msra.mxu0 0.0
        %628 = vmatprep.subr.mxu0 0.0
        %629 = vmatpush1.msra.mxu0 0.0
        %630 = vmatprep.subr.mxu0 0.0
        %631 = vmatpush1.msra.mxu0 0.0
        %632 = vmatprep.subr.mxu0 0.0
        %633 = vmatpush1.msra.mxu0 0.0
        %634 = vmatprep.subr.mxu0 0.0
        %635 = vmatpush1.msra.mxu0 0.0
        %636 = vmatprep.subr.mxu0 0.0
        %637 = vmatpush1.msra.mxu0 0.0
        %638 = vmatprep.subr.mxu0 0.0
        %639 = vmatpush1.msra.mxu0 0.0
        %640 = vmatprep.subr.mxu0 0.0
        %641 = vmatpush1.msra.mxu0 0.0
        %642 = vmatprep.mubr.f32.mxu0 0.0
        %643 = vmatmul.mubr.f32.gmra.mrb[0].mxu0 %v493
        %v644 = vpop.f32.mrb[0].mxu0
        %v645 = vadd.f32 %v488, %v644
        %v646 = vpop.f32.mrb[0].mxu0
        %v647 = vadd.f32 %v490, %v646
        %648 = vdwg.mxu0
        %649 = vrot.lane.b32.xlu0 %v241, 15
        %v650 = vpop.permute.xlu0 %649
        %651 = vrot.lane.b32.xlu0 %v245, 15
        %v652 = vpop.permute.xlu0 %651
        %653 = vrot.lane.b32.xlu0 %v242, 15
        %v654 = vpop.permute.xlu0 %653
        %655 = vrot.lane.b32.xlu0 %v246, 15
        %v656 = vpop.permute.xlu0 %655
        %vm657 = vcmp.lt.s32.totalorder %v258, 15
        %v658 = vsel %vm657, %v654, %v656
        %v659 = vsel %vm657, %v652, %v654
        %v660 = vsel %vm657, %v650, %v652
        %v661 = vsel %vm657, %v656, %v650
        %s662 = scalar_lea.vmem %s3, 8
        %v663 = vld [vmem:[%s662] sm:$0xf]
        %v665 = vlaneseq
        %v666 = vshrl.u32 %v665, 7
        %v667 = vsub.s32 0, %v666
        %v668 = vrot.slane %v663, %v667
        %v669 = vlaneseq
        %v670 = vshrl.u32 %v669, 7
        %v671 = vsub.s32 1, %v670
        %v672 = vrot.slane %v663, %v671
        %v673 = vlaneseq
        %v674 = vshrl.u32 %v673, 7
        %v675 = vsub.s32 2, %v674
        %v676 = vrot.slane %v663, %v675
        %v677 = vlaneseq
        %v678 = vshrl.u32 %v677, 7
        %v679 = vsub.s32 3, %v678
        %v680 = vrot.slane %v663, %v679
        %v685 = vmul.f32 %v661, %v668
        %v686 = vmul.f32 %v660, %v672
        %v687 = vmul.f32 %v659, %v676
        %v688 = vmul.f32 %v658, %v680
        %s689 = scalar_lea.vmem %s1, 16
        %v690 = vld [vmem:[%s689] sm:$0xff]
        %v692 = vsel %vm333, %v690, 0
        %v695 = vsel %vm337, %v685, 0
        %v698 = vsel %vm337, %v686, 0
        %v701 = vsel %vm337, %v687, 0
        %v704 = vsel %vm337, %v688, 0
        %706 = vmatprep.subr.mxu0 %v698
        %707 = vmatpush1.msra.mxu0 %v695
        %708 = vmatprep.subr.mxu0 0.0
        %709 = vmatpush1.msra.mxu0 0.0
        %710 = vmatprep.subr.mxu0 0.0
        %711 = vmatpush1.msra.mxu0 0.0
        %712 = vmatprep.subr.mxu0 0.0
        %713 = vmatpush1.msra.mxu0 0.0
        %714 = vmatprep.subr.mxu0 0.0
        %715 = vmatpush1.msra.mxu0 0.0
        %716 = vmatprep.subr.mxu0 0.0
        %717 = vmatpush1.msra.mxu0 0.0
        %718 = vmatprep.subr.mxu0 0.0
        %719 = vmatpush1.msra.mxu0 0.0
        %720 = vmatprep.subr.mxu0 0.0
        %721 = vmatpush1.msra.mxu0 0.0
        %722 = vmatprep.subr.mxu0 0.0
        %723 = vmatpush1.msra.mxu0 0.0
        %724 = vmatprep.subr.mxu0 0.0
        %725 = vmatpush1.msra.mxu0 0.0
        %726 = vmatprep.subr.mxu0 0.0
        %727 = vmatpush1.msra.mxu0 0.0
        %728 = vmatprep.subr.mxu0 0.0
        %729 = vmatpush1.msra.mxu0 0.0
        %730 = vmatprep.subr.mxu0 0.0
        %731 = vmatpush1.msra.mxu0 0.0
        %732 = vmatprep.subr.mxu0 0.0
        %733 = vmatpush1.msra.mxu0 0.0
        %734 = vmatprep.subr.mxu0 0.0
        %735 = vmatpush1.msra.mxu0 0.0
        %736 = vmatprep.subr.mxu0 0.0
        %737 = vmatpush1.msra.mxu0 0.0
        %738 = vmatprep.subr.mxu0 0.0
        %739 = vmatpush1.msra.mxu0 0.0
        %740 = vmatprep.subr.mxu0 0.0
        %741 = vmatpush1.msra.mxu0 0.0
        %742 = vmatprep.subr.mxu0 0.0
        %743 = vmatpush1.msra.mxu0 0.0
        %744 = vmatprep.subr.mxu0 0.0
        %745 = vmatpush1.msra.mxu0 0.0
        %746 = vmatprep.subr.mxu0 0.0
        %747 = vmatpush1.msra.mxu0 0.0
        %748 = vmatprep.subr.mxu0 0.0
        %749 = vmatpush1.msra.mxu0 0.0
        %750 = vmatprep.subr.mxu0 0.0
        %751 = vmatpush1.msra.mxu0 0.0
        %752 = vmatprep.subr.mxu0 0.0
        %753 = vmatpush1.msra.mxu0 0.0
        %754 = vmatprep.subr.mxu0 0.0
        %755 = vmatpush1.msra.mxu0 0.0
        %756 = vmatprep.subr.mxu0 0.0
        %757 = vmatpush1.msra.mxu0 0.0
        %758 = vmatprep.subr.mxu0 0.0
        %759 = vmatpush1.msra.mxu0 0.0
        %760 = vmatprep.subr.mxu0 0.0
        %761 = vmatpush1.msra.mxu0 0.0
        %762 = vmatprep.subr.mxu0 0.0
        %763 = vmatpush1.msra.mxu0 0.0
        %764 = vmatprep.subr.mxu0 0.0
        %765 = vmatpush1.msra.mxu0 0.0
        %766 = vmatprep.subr.mxu0 0.0
        %767 = vmatpush1.msra.mxu0 0.0
        %768 = vmatprep.subr.mxu0 0.0
        %769 = vmatpush1.msra.mxu0 0.0
        %770 = vmatprep.mubr.f32.mxu0 0.0
        %771 = vmatmul.mubr.f32.gmra.mrb[0].mxu0 %v692
        %v772 = vpop.f32.mrb[0].mxu0
        %v773 = vadd.f32 0.0, %v772
        %v774 = vpop.f32.mrb[0].mxu0
        %v775 = vadd.f32 0.0, %v774
        %776 = vdwg.mxu0
        %777 = vmatprep.subr.mxu0 %v704
        %778 = vmatpush1.msra.mxu0 %v701
        %779 = vmatprep.subr.mxu0 0.0
        %780 = vmatpush1.msra.mxu0 0.0
        %781 = vmatprep.subr.mxu0 0.0
        %782 = vmatpush1.msra.mxu0 0.0
        %783 = vmatprep.subr.mxu0 0.0
        %784 = vmatpush1.msra.mxu0 0.0
        %785 = vmatprep.subr.mxu0 0.0
        %786 = vmatpush1.msra.mxu0 0.0
        %787 = vmatprep.subr.mxu0 0.0
        %788 = vmatpush1.msra.mxu0 0.0
        %789 = vmatprep.subr.mxu0 0.0
        %790 = vmatpush1.msra.mxu0 0.0
        %791 = vmatprep.subr.mxu0 0.0
        %792 = vmatpush1.msra.mxu0 0.0
        %793 = vmatprep.subr.mxu0 0.0
        %794 = vmatpush1.msra.mxu0 0.0
        %795 = vmatprep.subr.mxu0 0.0
        %796 = vmatpush1.msra.mxu0 0.0
        %797 = vmatprep.subr.mxu0 0.0
        %798 = vmatpush1.msra.mxu0 0.0
        %799 = vmatprep.subr.mxu0 0.0
        %800 = vmatpush1.msra.mxu0 0.0
        %801 = vmatprep.subr.mxu0 0.0
        %802 = vmatpush1.msra.mxu0 0.0
        %803 = vmatprep.subr.mxu0 0.0
        %804 = vmatpush1.msra.mxu0 0.0
        %805 = vmatprep.subr.mxu0 0.0
        %806 = vmatpush1.msra.mxu0 0.0
        %807 = vmatprep.subr.mxu0 0.0
        %808 = vmatpush1.msra.mxu0 0.0
        %809 = vmatprep.subr.mxu0 0.0
        %810 = vmatpush1.msra.mxu0 0.0
        %811 = vmatprep.subr.mxu0 0.0
        %812 = vmatpush1.msra.mxu0 0.0
        %813 = vmatprep.subr.mxu0 0.0
        %814 = vmatpush1.msra.mxu0 0.0
        %815 = vmatprep.subr.mxu0 0.0
        %816 = vmatpush1.msra.mxu0 0.0
        %817 = vmatprep.subr.mxu0 0.0
        %818 = vmatpush1.msra.mxu0 0.0
        %819 = vmatprep.subr.mxu0 0.0
        %820 = vmatpush1.msra.mxu0 0.0
        %821 = vmatprep.subr.mxu0 0.0
        %822 = vmatpush1.msra.mxu0 0.0
        %823 = vmatprep.subr.mxu0 0.0
        %824 = vmatpush1.msra.mxu0 0.0
        %825 = vmatprep.subr.mxu0 0.0
        %826 = vmatpush1.msra.mxu0 0.0
        %827 = vmatprep.subr.mxu0 0.0
        %828 = vmatpush1.msra.mxu0 0.0
        %829 = vmatprep.subr.mxu0 0.0
        %830 = vmatpush1.msra.mxu0 0.0
        %831 = vmatprep.subr.mxu0 0.0
        %832 = vmatpush1.msra.mxu0 0.0
        %833 = vmatprep.subr.mxu0 0.0
        %834 = vmatpush1.msra.mxu0 0.0
        %835 = vmatprep.subr.mxu0 0.0
        %836 = vmatpush1.msra.mxu0 0.0
        %837 = vmatprep.subr.mxu0 0.0
        %838 = vmatpush1.msra.mxu0 0.0
        %839 = vmatprep.subr.mxu0 0.0
        %840 = vmatpush1.msra.mxu0 0.0
        %841 = vmatprep.mubr.f32.mxu0 0.0
        %842 = vmatmul.mubr.f32.gmra.mrb[0].mxu0 %v692
        %v843 = vpop.f32.mrb[0].mxu0
        %v844 = vadd.f32 0.0, %v843
        %v845 = vpop.f32.mrb[0].mxu0
        %v846 = vadd.f32 0.0, %v845
        %847 = vdwg.mxu0
        %v848 = vadd.f32 %v574, %v773
        %v849 = vadd.f32 %v576, %v775
        %v850 = vadd.f32 %v645, %v844
        %v851 = vadd.f32 %v647, %v846
        %852 = vrot.lane.b32.xlu0 %v241, 1
        %v853 = vpop.permute.xlu0 %852
        %854 = vrot.lane.b32.xlu0 %v245, 1
        %v855 = vpop.permute.xlu0 %854
        %856 = vrot.lane.b32.xlu0 %v242, 1
        %v857 = vpop.permute.xlu0 %856
        %858 = vrot.lane.b32.xlu0 %v246, 1
        %v859 = vpop.permute.xlu0 %858
        %vm860 = vcmp.lt.s32.totalorder %v258, 1
        %v861 = vsel %vm860, %v857, %v859
        %v862 = vsel %vm860, %v855, %v857
        %v863 = vsel %vm860, %v853, %v855
        %v864 = vsel %vm860, %v859, %v853
        %s865 = scalar_lea.vmem %s3, 12
        %v866 = vld [vmem:[%s865] sm:$0xf]
        %v868 = vlaneseq
        %v869 = vshrl.u32 %v868, 7
        %v870 = vsub.s32 0, %v869
        %v871 = vrot.slane %v866, %v870
        %v872 = vlaneseq
        %v873 = vshrl.u32 %v872, 7
        %v874 = vsub.s32 1, %v873
        %v875 = vrot.slane %v866, %v874
        %v876 = vlaneseq
        %v877 = vshrl.u32 %v876, 7
        %v878 = vsub.s32 2, %v877
        %v879 = vrot.slane %v866, %v878
        %v880 = vlaneseq
        %v881 = vshrl.u32 %v880, 7
        %v882 = vsub.s32 3, %v881
        %v883 = vrot.slane %v866, %v882
        %v888 = vmul.f32 %v864, %v871
        %v889 = vmul.f32 %v863, %v875
        %v890 = vmul.f32 %v862, %v879
        %v891 = vmul.f32 %v861, %v883
        %s892 = scalar_lea.vmem %s1, 24
        %v893 = vld [vmem:[%s892] sm:$0xff]
        %v895 = vsel %vm333, %v893, 0
        %v898 = vsel %vm337, %v888, 0
        %v901 = vsel %vm337, %v889, 0
        %v904 = vsel %vm337, %v890, 0
        %v907 = vsel %vm337, %v891, 0
        %909 = vmatprep.subr.mxu0 %v901
        %910 = vmatpush1.msra.mxu0 %v898
        %911 = vmatprep.subr.mxu0 0.0
        %912 = vmatpush1.msra.mxu0 0.0
        %913 = vmatprep.subr.mxu0 0.0
        %914 = vmatpush1.msra.mxu0 0.0
        %915 = vmatprep.subr.mxu0 0.0
        %916 = vmatpush1.msra.mxu0 0.0
        %917 = vmatprep.subr.mxu0 0.0
        %918 = vmatpush1.msra.mxu0 0.0
        %919 = vmatprep.subr.mxu0 0.0
        %920 = vmatpush1.msra.mxu0 0.0
        %921 = vmatprep.subr.mxu0 0.0
        %922 = vmatpush1.msra.mxu0 0.0
        %923 = vmatprep.subr.mxu0 0.0
        %924 = vmatpush1.msra.mxu0 0.0
        %925 = vmatprep.subr.mxu0 0.0
        %926 = vmatpush1.msra.mxu0 0.0
        %927 = vmatprep.subr.mxu0 0.0
        %928 = vmatpush1.msra.mxu0 0.0
        %929 = vmatprep.subr.mxu0 0.0
        %930 = vmatpush1.msra.mxu0 0.0
        %931 = vmatprep.subr.mxu0 0.0
        %932 = vmatpush1.msra.mxu0 0.0
        %933 = vmatprep.subr.mxu0 0.0
        %934 = vmatpush1.msra.mxu0 0.0
        %935 = vmatprep.subr.mxu0 0.0
        %936 = vmatpush1.msra.mxu0 0.0
        %937 = vmatprep.subr.mxu0 0.0
        %938 = vmatpush1.msra.mxu0 0.0
        %939 = vmatprep.subr.mxu0 0.0
        %940 = vmatpush1.msra.mxu0 0.0
        %941 = vmatprep.subr.mxu0 0.0
        %942 = vmatpush1.msra.mxu0 0.0
        %943 = vmatprep.subr.mxu0 0.0
        %944 = vmatpush1.msra.mxu0 0.0
        %945 = vmatprep.subr.mxu0 0.0
        %946 = vmatpush1.msra.mxu0 0.0
        %947 = vmatprep.subr.mxu0 0.0
        %948 = vmatpush1.msra.mxu0 0.0
        %949 = vmatprep.subr.mxu0 0.0
        %950 = vmatpush1.msra.mxu0 0.0
        %951 = vmatprep.subr.mxu0 0.0
        %952 = vmatpush1.msra.mxu0 0.0
        %953 = vmatprep.subr.mxu0 0.0
        %954 = vmatpush1.msra.mxu0 0.0
        %955 = vmatprep.subr.mxu0 0.0
        %956 = vmatpush1.msra.mxu0 0.0
        %957 = vmatprep.subr.mxu0 0.0
        %958 = vmatpush1.msra.mxu0 0.0
        %959 = vmatprep.subr.mxu0 0.0
        %960 = vmatpush1.msra.mxu0 0.0
        %961 = vmatprep.subr.mxu0 0.0
        %962 = vmatpush1.msra.mxu0 0.0
        %963 = vmatprep.subr.mxu0 0.0
        %964 = vmatpush1.msra.mxu0 0.0
        %965 = vmatprep.subr.mxu0 0.0
        %966 = vmatpush1.msra.mxu0 0.0
        %967 = vmatprep.subr.mxu0 0.0
        %968 = vmatpush1.msra.mxu0 0.0
        %969 = vmatprep.subr.mxu0 0.0
        %970 = vmatpush1.msra.mxu0 0.0
        %971 = vmatprep.subr.mxu0 0.0
        %972 = vmatpush1.msra.mxu0 0.0
        %973 = vmatprep.mubr.f32.mxu0 0.0
        %974 = vmatmul.mubr.f32.gmra.mrb[0].mxu0 %v895
        %v975 = vpop.f32.mrb[0].mxu0
        %v976 = vadd.f32 0.0, %v975
        %v977 = vpop.f32.mrb[0].mxu0
        %v978 = vadd.f32 0.0, %v977
        %979 = vdwg.mxu0
        %980 = vmatprep.subr.mxu0 %v907
        %981 = vmatpush1.msra.mxu0 %v904
        %982 = vmatprep.subr.mxu0 0.0
        %983 = vmatpush1.msra.mxu0 0.0
        %984 = vmatprep.subr.mxu0 0.0
        %985 = vmatpush1.msra.mxu0 0.0
        %986 = vmatprep.subr.mxu0 0.0
        %987 = vmatpush1.msra.mxu0 0.0
        %988 = vmatprep.subr.mxu0 0.0
        %989 = vmatpush1.msra.mxu0 0.0
        %990 = vmatprep.subr.mxu0 0.0
        %991 = vmatpush1.msra.mxu0 0.0
        %992 = vmatprep.subr.mxu0 0.0
        %993 = vmatpush1.msra.mxu0 0.0
        %994 = vmatprep.subr.mxu0 0.0
        %995 = vmatpush1.msra.mxu0 0.0
        %996 = vmatprep.subr.mxu0 0.0
        %997 = vmatpush1.msra.mxu0 0.0
        %998 = vmatprep.subr.mxu0 0.0
        %999 = vmatpush1.msra.mxu0 0.0
        %1000 = vmatprep.subr.mxu0 0.0
        %1001 = vmatpush1.msra.mxu0 0.0
        %1002 = vmatprep.subr.mxu0 0.0
        %1003 = vmatpush1.msra.mxu0 0.0
        %1004 = vmatprep.subr.mxu0 0.0
        %1005 = vmatpush1.msra.mxu0 0.0
        %1006 = vmatprep.subr.mxu0 0.0
        %1007 = vmatpush1.msra.mxu0 0.0
        %1008 = vmatprep.subr.mxu0 0.0
        %1009 = vmatpush1.msra.mxu0 0.0
        %1010 = vmatprep.subr.mxu0 0.0
        %1011 = vmatpush1.msra.mxu0 0.0
        %1012 = vmatprep.subr.mxu0 0.0
        %1013 = vmatpush1.msra.mxu0 0.0
        %1014 = vmatprep.subr.mxu0 0.0
        %1015 = vmatpush1.msra.mxu0 0.0
        %1016 = vmatprep.subr.mxu0 0.0
        %1017 = vmatpush1.msra.mxu0 0.0
        %1018 = vmatprep.subr.mxu0 0.0
        %1019 = vmatpush1.msra.mxu0 0.0
        %1020 = vmatprep.subr.mxu0 0.0
        %1021 = vmatpush1.msra.mxu0 0.0
        %1022 = vmatprep.subr.mxu0 0.0
        %1023 = vmatpush1.msra.mxu0 0.0
        %1024 = vmatprep.subr.mxu0 0.0
        %1025 = vmatpush1.msra.mxu0 0.0
        %1026 = vmatprep.subr.mxu0 0.0
        %1027 = vmatpush1.msra.mxu0 0.0
        %1028 = vmatprep.subr.mxu0 0.0
        %1029 = vmatpush1.msra.mxu0 0.0
        %1030 = vmatprep.subr.mxu0 0.0
        %1031 = vmatpush1.msra.mxu0 0.0
        %1032 = vmatprep.subr.mxu0 0.0
        %1033 = vmatpush1.msra.mxu0 0.0
        %1034 = vmatprep.subr.mxu0 0.0
        %1035 = vmatpush1.msra.mxu0 0.0
        %1036 = vmatprep.subr.mxu0 0.0
        %1037 = vmatpush1.msra.mxu0 0.0
        %1038 = vmatprep.subr.mxu0 0.0
        %1039 = vmatpush1.msra.mxu0 0.0
        %1040 = vmatprep.subr.mxu0 0.0
        %1041 = vmatpush1.msra.mxu0 0.0
        %1042 = vmatprep.subr.mxu0 0.0
        %1043 = vmatpush1.msra.mxu0 0.0
        %1044 = vmatprep.mubr.f32.mxu0 0.0
        %1045 = vmatmul.mubr.f32.gmra.mrb[0].mxu0 %v895
        %v1046 = vpop.f32.mrb[0].mxu0
        %v1047 = vadd.f32 0.0, %v1046
        %v1048 = vpop.f32.mrb[0].mxu0
        %v1049 = vadd.f32 0.0, %v1048
        %1050 = vdwg.mxu0
        %v1051 = vadd.f32 %v848, %v976
        %v1052 = vadd.f32 %v849, %v978
        %v1053 = vadd.f32 %v850, %v1047
        %v1054 = vadd.f32 %v851, %v1049
        %s1055 = scalar_lea.vmem %s1, 32
        %v1056 = vld [vmem:[%s1055] sm:$0xff]
        %v1058 = vsel %vm333, %v1056, 0
        %v1060 = vsel %vm337, %v241, 0
        %v1062 = vsel %vm337, %v245, 0
        %v1064 = vsel %vm337, %v242, 0
        %v1066 = vsel %vm337, %v246, 0
        %1068 = vmatprep.subr.mxu0 %v1062
        %1069 = vmatpush1.msra.mxu0 %v1060
        %1070 = vmatprep.subr.mxu0 0.0
        %1071 = vmatpush1.msra.mxu0 0.0
        %1072 = vmatprep.subr.mxu0 0.0
        %1073 = vmatpush1.msra.mxu0 0.0
        %1074 = vmatprep.subr.mxu0 0.0
        %1075 = vmatpush1.msra.mxu0 0.0
        %1076 = vmatprep.subr.mxu0 0.0
        %1077 = vmatpush1.msra.mxu0 0.0
        %1078 = vmatprep.subr.mxu0 0.0
        %1079 = vmatpush1.msra.mxu0 0.0
        %1080 = vmatprep.subr.mxu0 0.0
        %1081 = vmatpush1.msra.mxu0 0.0
        %1082 = vmatprep.subr.mxu0 0.0
        %1083 = vmatpush1.msra.mxu0 0.0
        %1084 = vmatprep.subr.mxu0 0.0
        %1085 = vmatpush1.msra.mxu0 0.0
        %1086 = vmatprep.subr.mxu0 0.0
        %1087 = vmatpush1.msra.mxu0 0.0
        %1088 = vmatprep.subr.mxu0 0.0
        %1089 = vmatpush1.msra.mxu0 0.0
        %1090 = vmatprep.subr.mxu0 0.0
        %1091 = vmatpush1.msra.mxu0 0.0
        %1092 = vmatprep.subr.mxu0 0.0
        %1093 = vmatpush1.msra.mxu0 0.0
        %1094 = vmatprep.subr.mxu0 0.0
        %1095 = vmatpush1.msra.mxu0 0.0
        %1096 = vmatprep.subr.mxu0 0.0
        %1097 = vmatpush1.msra.mxu0 0.0
        %1098 = vmatprep.subr.mxu0 0.0
        %1099 = vmatpush1.msra.mxu0 0.0
        %1100 = vmatprep.subr.mxu0 0.0
        %1101 = vmatpush1.msra.mxu0 0.0
        %1102 = vmatprep.subr.mxu0 0.0
        %1103 = vmatpush1.msra.mxu0 0.0
        %1104 = vmatprep.subr.mxu0 0.0
        %1105 = vmatpush1.msra.mxu0 0.0
        %1106 = vmatprep.subr.mxu0 0.0
        %1107 = vmatpush1.msra.mxu0 0.0
        %1108 = vmatprep.subr.mxu0 0.0
        %1109 = vmatpush1.msra.mxu0 0.0
        %1110 = vmatprep.subr.mxu0 0.0
        %1111 = vmatpush1.msra.mxu0 0.0
        %1112 = vmatprep.subr.mxu0 0.0
        %1113 = vmatpush1.msra.mxu0 0.0
        %1114 = vmatprep.subr.mxu0 0.0
        %1115 = vmatpush1.msra.mxu0 0.0
        %1116 = vmatprep.subr.mxu0 0.0
        %1117 = vmatpush1.msra.mxu0 0.0
        %1118 = vmatprep.subr.mxu0 0.0
        %1119 = vmatpush1.msra.mxu0 0.0
        %1120 = vmatprep.subr.mxu0 0.0
        %1121 = vmatpush1.msra.mxu0 0.0
        %1122 = vmatprep.subr.mxu0 0.0
        %1123 = vmatpush1.msra.mxu0 0.0
        %1124 = vmatprep.subr.mxu0 0.0
        %1125 = vmatpush1.msra.mxu0 0.0
        %1126 = vmatprep.subr.mxu0 0.0
        %1127 = vmatpush1.msra.mxu0 0.0
        %1128 = vmatprep.subr.mxu0 0.0
        %1129 = vmatpush1.msra.mxu0 0.0
        %1130 = vmatprep.subr.mxu0 0.0
        %1131 = vmatpush1.msra.mxu0 0.0
        %1132 = vmatprep.mubr.f32.mxu0 0.0
        %1133 = vmatmul.mubr.f32.gmra.mrb[0].mxu0 %v1058
        %v1134 = vpop.f32.mrb[0].mxu0
        %v1135 = vadd.f32 0.0, %v1134
        %v1136 = vpop.f32.mrb[0].mxu0
        %v1137 = vadd.f32 0.0, %v1136
        %1138 = vdwg.mxu0
        %1139 = vmatprep.subr.mxu0 %v1066
        %1140 = vmatpush1.msra.mxu0 %v1064
        %1141 = vmatprep.subr.mxu0 0.0
        %1142 = vmatpush1.msra.mxu0 0.0
        %1143 = vmatprep.subr.mxu0 0.0
        %1144 = vmatpush1.msra.mxu0 0.0
        %1145 = vmatprep.subr.mxu0 0.0
        %1146 = vmatpush1.msra.mxu0 0.0
        %1147 = vmatprep.subr.mxu0 0.0
        %1148 = vmatpush1.msra.mxu0 0.0
        %1149 = vmatprep.subr.mxu0 0.0
        %1150 = vmatpush1.msra.mxu0 0.0
        %1151 = vmatprep.subr.mxu0 0.0
        %1152 = vmatpush1.msra.mxu0 0.0
        %1153 = vmatprep.subr.mxu0 0.0
        %1154 = vmatpush1.msra.mxu0 0.0
        %1155 = vmatprep.subr.mxu0 0.0
        %1156 = vmatpush1.msra.mxu0 0.0
        %1157 = vmatprep.subr.mxu0 0.0
        %1158 = vmatpush1.msra.mxu0 0.0
        %1159 = vmatprep.subr.mxu0 0.0
        %1160 = vmatpush1.msra.mxu0 0.0
        %1161 = vmatprep.subr.mxu0 0.0
        %1162 = vmatpush1.msra.mxu0 0.0
        %1163 = vmatprep.subr.mxu0 0.0
        %1164 = vmatpush1.msra.mxu0 0.0
        %1165 = vmatprep.subr.mxu0 0.0
        %1166 = vmatpush1.msra.mxu0 0.0
        %1167 = vmatprep.subr.mxu0 0.0
        %1168 = vmatpush1.msra.mxu0 0.0
        %1169 = vmatprep.subr.mxu0 0.0
        %1170 = vmatpush1.msra.mxu0 0.0
        %1171 = vmatprep.subr.mxu0 0.0
        %1172 = vmatpush1.msra.mxu0 0.0
        %1173 = vmatprep.subr.mxu0 0.0
        %1174 = vmatpush1.msra.mxu0 0.0
        %1175 = vmatprep.subr.mxu0 0.0
        %1176 = vmatpush1.msra.mxu0 0.0
        %1177 = vmatprep.subr.mxu0 0.0
        %1178 = vmatpush1.msra.mxu0 0.0
        %1179 = vmatprep.subr.mxu0 0.0
        %1180 = vmatpush1.msra.mxu0 0.0
        %1181 = vmatprep.subr.mxu0 0.0
        %1182 = vmatpush1.msra.mxu0 0.0
        %1183 = vmatprep.subr.mxu0 0.0
        %1184 = vmatpush1.msra.mxu0 0.0
        %1185 = vmatprep.subr.mxu0 0.0
        %1186 = vmatpush1.msra.mxu0 0.0
        %1187 = vmatprep.subr.mxu0 0.0
        %1188 = vmatpush1.msra.mxu0 0.0
        %1189 = vmatprep.subr.mxu0 0.0
        %1190 = vmatpush1.msra.mxu0 0.0
        %1191 = vmatprep.subr.mxu0 0.0
        %1192 = vmatpush1.msra.mxu0 0.0
        %1193 = vmatprep.subr.mxu0 0.0
        %1194 = vmatpush1.msra.mxu0 0.0
        %1195 = vmatprep.subr.mxu0 0.0
        %1196 = vmatpush1.msra.mxu0 0.0
        %1197 = vmatprep.subr.mxu0 0.0
        %1198 = vmatpush1.msra.mxu0 0.0
        %1199 = vmatprep.subr.mxu0 0.0
        %1200 = vmatpush1.msra.mxu0 0.0
        %1201 = vmatprep.subr.mxu0 0.0
        %1202 = vmatpush1.msra.mxu0 0.0
        %1203 = vmatprep.mubr.f32.mxu0 0.0
        %1204 = vmatmul.mubr.f32.gmra.mrb[0].mxu0 %v1058
        %v1205 = vpop.f32.mrb[0].mxu0
        %v1206 = vadd.f32 0.0, %v1205
        %v1207 = vpop.f32.mrb[0].mxu0
        %v1208 = vadd.f32 0.0, %v1207
        %1209 = vdwg.mxu0
        %v1210 = vadd.f32 %v1051, %v1135
        %v1211 = vadd.f32 %v1052, %v1137
        %v1212 = vadd.f32 %v1053, %v1206
        %v1213 = vadd.f32 %v1054, %v1208
        %1214 = vrot.lane.b32.xlu0 %v241, 127
        %v1215 = vpop.permute.xlu0 %1214
        %1216 = vrot.lane.b32.xlu0 %v245, 127
        %v1217 = vpop.permute.xlu0 %1216
        %1218 = vrot.lane.b32.xlu0 %v242, 127
        %v1219 = vpop.permute.xlu0 %1218
        %1220 = vrot.lane.b32.xlu0 %v246, 127
        %v1221 = vpop.permute.xlu0 %1220
        %vm1222 = vcmp.lt.s32.totalorder %v258, 127
        %v1223 = vsel %vm1222, %v1219, %v1221
        %v1224 = vsel %vm1222, %v1217, %v1219
        %v1225 = vsel %vm1222, %v1215, %v1217
        %v1226 = vsel %vm1222, %v1221, %v1215
        %s1227 = scalar_lea.vmem %s3, 20
        %v1228 = vld [vmem:[%s1227] sm:$0xf]
        %v1230 = vlaneseq
        %v1231 = vshrl.u32 %v1230, 7
        %v1232 = vsub.s32 0, %v1231
        %v1233 = vrot.slane %v1228, %v1232
        %v1234 = vlaneseq
        %v1235 = vshrl.u32 %v1234, 7
        %v1236 = vsub.s32 1, %v1235
        %v1237 = vrot.slane %v1228, %v1236
        %v1238 = vlaneseq
        %v1239 = vshrl.u32 %v1238, 7
        %v1240 = vsub.s32 2, %v1239
        %v1241 = vrot.slane %v1228, %v1240
        %v1242 = vlaneseq
        %v1243 = vshrl.u32 %v1242, 7
        %v1244 = vsub.s32 3, %v1243
        %v1245 = vrot.slane %v1228, %v1244
        %v1250 = vmul.f32 %v1225, %v1233
        %v1251 = vmul.f32 %v1224, %v1237
        %v1252 = vmul.f32 %v1223, %v1241
        %v1253 = vmul.f32 %v1226, %v1245
        %s1254 = scalar_lea.vmem %s1, 40
        %v1255 = vld [vmem:[%s1254] sm:$0xff]
        %v1257 = vsel %vm333, %v1255, 0
        %v1260 = vsel %vm337, %v1250, 0
        %v1263 = vsel %vm337, %v1251, 0
        %v1266 = vsel %vm337, %v1252, 0
        %v1269 = vsel %vm337, %v1253, 0
        %1271 = vmatprep.subr.mxu0 %v1263
        %1272 = vmatpush1.msra.mxu0 %v1260
        %1273 = vmatprep.subr.mxu0 0.0
        %1274 = vmatpush1.msra.mxu0 0.0
        %1275 = vmatprep.subr.mxu0 0.0
        %1276 = vmatpush1.msra.mxu0 0.0
        %1277 = vmatprep.subr.mxu0 0.0
        %1278 = vmatpush1.msra.mxu0 0.0
        %1279 = vmatprep.subr.mxu0 0.0
        %1280 = vmatpush1.msra.mxu0 0.0
        %1281 = vmatprep.subr.mxu0 0.0
        %1282 = vmatpush1.msra.mxu0 0.0
        %1283 = vmatprep.subr.mxu0 0.0
        %1284 = vmatpush1.msra.mxu0 0.0
        %1285 = vmatprep.subr.mxu0 0.0
        %1286 = vmatpush1.msra.mxu0 0.0
        %1287 = vmatprep.subr.mxu0 0.0
        %1288 = vmatpush1.msra.mxu0 0.0
        %1289 = vmatprep.subr.mxu0 0.0
        %1290 = vmatpush1.msra.mxu0 0.0
        %1291 = vmatprep.subr.mxu0 0.0
        %1292 = vmatpush1.msra.mxu0 0.0
        %1293 = vmatprep.subr.mxu0 0.0
        %1294 = vmatpush1.msra.mxu0 0.0
        %1295 = vmatprep.subr.mxu0 0.0
        %1296 = vmatpush1.msra.mxu0 0.0
        %1297 = vmatprep.subr.mxu0 0.0
        %1298 = vmatpush1.msra.mxu0 0.0
        %1299 = vmatprep.subr.mxu0 0.0
        %1300 = vmatpush1.msra.mxu0 0.0
        %1301 = vmatprep.subr.mxu0 0.0
        %1302 = vmatpush1.msra.mxu0 0.0
        %1303 = vmatprep.subr.mxu0 0.0
        %1304 = vmatpush1.msra.mxu0 0.0
        %1305 = vmatprep.subr.mxu0 0.0
        %1306 = vmatpush1.msra.mxu0 0.0
        %1307 = vmatprep.subr.mxu0 0.0
        %1308 = vmatpush1.msra.mxu0 0.0
        %1309 = vmatprep.subr.mxu0 0.0
        %1310 = vmatpush1.msra.mxu0 0.0
        %1311 = vmatprep.subr.mxu0 0.0
        %1312 = vmatpush1.msra.mxu0 0.0
        %1313 = vmatprep.subr.mxu0 0.0
        %1314 = vmatpush1.msra.mxu0 0.0
        %1315 = vmatprep.subr.mxu0 0.0
        %1316 = vmatpush1.msra.mxu0 0.0
        %1317 = vmatprep.subr.mxu0 0.0
        %1318 = vmatpush1.msra.mxu0 0.0
        %1319 = vmatprep.subr.mxu0 0.0
        %1320 = vmatpush1.msra.mxu0 0.0
        %1321 = vmatprep.subr.mxu0 0.0
        %1322 = vmatpush1.msra.mxu0 0.0
        %1323 = vmatprep.subr.mxu0 0.0
        %1324 = vmatpush1.msra.mxu0 0.0
        %1325 = vmatprep.subr.mxu0 0.0
        %1326 = vmatpush1.msra.mxu0 0.0
        %1327 = vmatprep.subr.mxu0 0.0
        %1328 = vmatpush1.msra.mxu0 0.0
        %1329 = vmatprep.subr.mxu0 0.0
        %1330 = vmatpush1.msra.mxu0 0.0
        %1331 = vmatprep.subr.mxu0 0.0
        %1332 = vmatpush1.msra.mxu0 0.0
        %1333 = vmatprep.subr.mxu0 0.0
        %1334 = vmatpush1.msra.mxu0 0.0
        %1335 = vmatprep.mubr.f32.mxu0 0.0
        %1336 = vmatmul.mubr.f32.gmra.mrb[0].mxu0 %v1257
        %v1337 = vpop.f32.mrb[0].mxu0
        %v1338 = vadd.f32 0.0, %v1337
        %v1339 = vpop.f32.mrb[0].mxu0
        %v1340 = vadd.f32 0.0, %v1339
        %1341 = vdwg.mxu0
        %1342 = vmatprep.subr.mxu0 %v1269
        %1343 = vmatpush1.msra.mxu0 %v1266
        %1344 = vmatprep.subr.mxu0 0.0
        %1345 = vmatpush1.msra.mxu0 0.0
        %1346 = vmatprep.subr.mxu0 0.0
        %1347 = vmatpush1.msra.mxu0 0.0
        %1348 = vmatprep.subr.mxu0 0.0
        %1349 = vmatpush1.msra.mxu0 0.0
        %1350 = vmatprep.subr.mxu0 0.0
        %1351 = vmatpush1.msra.mxu0 0.0
        %1352 = vmatprep.subr.mxu0 0.0
        %1353 = vmatpush1.msra.mxu0 0.0
        %1354 = vmatprep.subr.mxu0 0.0
        %1355 = vmatpush1.msra.mxu0 0.0
        %1356 = vmatprep.subr.mxu0 0.0
        %1357 = vmatpush1.msra.mxu0 0.0
        %1358 = vmatprep.subr.mxu0 0.0
        %1359 = vmatpush1.msra.mxu0 0.0
        %1360 = vmatprep.subr.mxu0 0.0
        %1361 = vmatpush1.msra.mxu0 0.0
        %1362 = vmatprep.subr.mxu0 0.0
        %1363 = vmatpush1.msra.mxu0 0.0
        %1364 = vmatprep.subr.mxu0 0.0
        %1365 = vmatpush1.msra.mxu0 0.0
        %1366 = vmatprep.subr.mxu0 0.0
        %1367 = vmatpush1.msra.mxu0 0.0
        %1368 = vmatprep.subr.mxu0 0.0
        %1369 = vmatpush1.msra.mxu0 0.0
        %1370 = vmatprep.subr.mxu0 0.0
        %1371 = vmatpush1.msra.mxu0 0.0
        %1372 = vmatprep.subr.mxu0 0.0
        %1373 = vmatpush1.msra.mxu0 0.0
        %1374 = vmatprep.subr.mxu0 0.0
        %1375 = vmatpush1.msra.mxu0 0.0
        %1376 = vmatprep.subr.mxu0 0.0
        %1377 = vmatpush1.msra.mxu0 0.0
        %1378 = vmatprep.subr.mxu0 0.0
        %1379 = vmatpush1.msra.mxu0 0.0
        %1380 = vmatprep.subr.mxu0 0.0
        %1381 = vmatpush1.msra.mxu0 0.0
        %1382 = vmatprep.subr.mxu0 0.0
        %1383 = vmatpush1.msra.mxu0 0.0
        %1384 = vmatprep.subr.mxu0 0.0
        %1385 = vmatpush1.msra.mxu0 0.0
        %1386 = vmatprep.subr.mxu0 0.0
        %1387 = vmatpush1.msra.mxu0 0.0
        %1388 = vmatprep.subr.mxu0 0.0
        %1389 = vmatpush1.msra.mxu0 0.0
        %1390 = vmatprep.subr.mxu0 0.0
        %1391 = vmatpush1.msra.mxu0 0.0
        %1392 = vmatprep.subr.mxu0 0.0
        %1393 = vmatpush1.msra.mxu0 0.0
        %1394 = vmatprep.subr.mxu0 0.0
        %1395 = vmatpush1.msra.mxu0 0.0
        %1396 = vmatprep.subr.mxu0 0.0
        %1397 = vmatpush1.msra.mxu0 0.0
        %1398 = vmatprep.subr.mxu0 0.0
        %1399 = vmatpush1.msra.mxu0 0.0
        %1400 = vmatprep.subr.mxu0 0.0
        %1401 = vmatpush1.msra.mxu0 0.0
        %1402 = vmatprep.subr.mxu0 0.0
        %1403 = vmatpush1.msra.mxu0 0.0
        %1404 = vmatprep.subr.mxu0 0.0
        %1405 = vmatpush1.msra.mxu0 0.0
        %1406 = vmatprep.mubr.f32.mxu0 0.0
        %1407 = vmatmul.mubr.f32.gmra.mrb[0].mxu0 %v1257
        %v1408 = vpop.f32.mrb[0].mxu0
        %v1409 = vadd.f32 0.0, %v1408
        %v1410 = vpop.f32.mrb[0].mxu0
        %v1411 = vadd.f32 0.0, %v1410
        %1412 = vdwg.mxu0
        %v1413 = vadd.f32 %v1210, %v1338
        %v1414 = vadd.f32 %v1211, %v1340
        %v1415 = vadd.f32 %v1212, %v1409
        %v1416 = vadd.f32 %v1213, %v1411
        %1417 = vrot.lane.b32.xlu0 %v241, 113
        %v1418 = vpop.permute.xlu0 %1417
        %1419 = vrot.lane.b32.xlu0 %v245, 113
        %v1420 = vpop.permute.xlu0 %1419
        %1421 = vrot.lane.b32.xlu0 %v242, 113
        %v1422 = vpop.permute.xlu0 %1421
        %1423 = vrot.lane.b32.xlu0 %v246, 113
        %v1424 = vpop.permute.xlu0 %1423
        %vm1425 = vcmp.lt.s32.totalorder %v258, 113
        %v1426 = vsel %vm1425, %v1422, %v1424
        %v1427 = vsel %vm1425, %v1420, %v1422
        %v1428 = vsel %vm1425, %v1418, %v1420
        %v1429 = vsel %vm1425, %v1424, %v1418
        %s1430 = scalar_lea.vmem %s3, 24
        %v1431 = vld [vmem:[%s1430] sm:$0xf]
        %v1433 = vlaneseq
        %v1434 = vshrl.u32 %v1433, 7
        %v1435 = vsub.s32 0, %v1434
        %v1436 = vrot.slane %v1431, %v1435
        %v1437 = vlaneseq
        %v1438 = vshrl.u32 %v1437, 7
        %v1439 = vsub.s32 1, %v1438
        %v1440 = vrot.slane %v1431, %v1439
        %v1441 = vlaneseq
        %v1442 = vshrl.u32 %v1441, 7
        %v1443 = vsub.s32 2, %v1442
        %v1444 = vrot.slane %v1431, %v1443
        %v1445 = vlaneseq
        %v1446 = vshrl.u32 %v1445, 7
        %v1447 = vsub.s32 3, %v1446
        %v1448 = vrot.slane %v1431, %v1447
        %v1453 = vmul.f32 %v1428, %v1436
        %v1454 = vmul.f32 %v1427, %v1440
        %v1455 = vmul.f32 %v1426, %v1444
        %v1456 = vmul.f32 %v1429, %v1448
        %s1457 = scalar_lea.vmem %s1, 48
        %v1458 = vld [vmem:[%s1457] sm:$0xff]
        %v1460 = vsel %vm333, %v1458, 0
        %v1463 = vsel %vm337, %v1453, 0
        %v1466 = vsel %vm337, %v1454, 0
        %v1469 = vsel %vm337, %v1455, 0
        %v1472 = vsel %vm337, %v1456, 0
        %1474 = vmatprep.subr.mxu0 %v1466
        %1475 = vmatpush1.msra.mxu0 %v1463
        %1476 = vmatprep.subr.mxu0 0.0
        %1477 = vmatpush1.msra.mxu0 0.0
        %1478 = vmatprep.subr.mxu0 0.0
        %1479 = vmatpush1.msra.mxu0 0.0
        %1480 = vmatprep.subr.mxu0 0.0
        %1481 = vmatpush1.msra.mxu0 0.0
        %1482 = vmatprep.subr.mxu0 0.0
        %1483 = vmatpush1.msra.mxu0 0.0
        %1484 = vmatprep.subr.mxu0 0.0
        %1485 = vmatpush1.msra.mxu0 0.0
        %1486 = vmatprep.subr.mxu0 0.0
        %1487 = vmatpush1.msra.mxu0 0.0
        %1488 = vmatprep.subr.mxu0 0.0
        %1489 = vmatpush1.msra.mxu0 0.0
        %1490 = vmatprep.subr.mxu0 0.0
        %1491 = vmatpush1.msra.mxu0 0.0
        %1492 = vmatprep.subr.mxu0 0.0
        %1493 = vmatpush1.msra.mxu0 0.0
        %1494 = vmatprep.subr.mxu0 0.0
        %1495 = vmatpush1.msra.mxu0 0.0
        %1496 = vmatprep.subr.mxu0 0.0
        %1497 = vmatpush1.msra.mxu0 0.0
        %1498 = vmatprep.subr.mxu0 0.0
        %1499 = vmatpush1.msra.mxu0 0.0
        %1500 = vmatprep.subr.mxu0 0.0
        %1501 = vmatpush1.msra.mxu0 0.0
        %1502 = vmatprep.subr.mxu0 0.0
        %1503 = vmatpush1.msra.mxu0 0.0
        %1504 = vmatprep.subr.mxu0 0.0
        %1505 = vmatpush1.msra.mxu0 0.0
        %1506 = vmatprep.subr.mxu0 0.0
        %1507 = vmatpush1.msra.mxu0 0.0
        %1508 = vmatprep.subr.mxu0 0.0
        %1509 = vmatpush1.msra.mxu0 0.0
        %1510 = vmatprep.subr.mxu0 0.0
        %1511 = vmatpush1.msra.mxu0 0.0
        %1512 = vmatprep.subr.mxu0 0.0
        %1513 = vmatpush1.msra.mxu0 0.0
        %1514 = vmatprep.subr.mxu0 0.0
        %1515 = vmatpush1.msra.mxu0 0.0
        %1516 = vmatprep.subr.mxu0 0.0
        %1517 = vmatpush1.msra.mxu0 0.0
        %1518 = vmatprep.subr.mxu0 0.0
        %1519 = vmatpush1.msra.mxu0 0.0
        %1520 = vmatprep.subr.mxu0 0.0
        %1521 = vmatpush1.msra.mxu0 0.0
        %1522 = vmatprep.subr.mxu0 0.0
        %1523 = vmatpush1.msra.mxu0 0.0
        %1524 = vmatprep.subr.mxu0 0.0
        %1525 = vmatpush1.msra.mxu0 0.0
        %1526 = vmatprep.subr.mxu0 0.0
        %1527 = vmatpush1.msra.mxu0 0.0
        %1528 = vmatprep.subr.mxu0 0.0
        %1529 = vmatpush1.msra.mxu0 0.0
        %1530 = vmatprep.subr.mxu0 0.0
        %1531 = vmatpush1.msra.mxu0 0.0
        %1532 = vmatprep.subr.mxu0 0.0
        %1533 = vmatpush1.msra.mxu0 0.0
        %1534 = vmatprep.subr.mxu0 0.0
        %1535 = vmatpush1.msra.mxu0 0.0
        %1536 = vmatprep.subr.mxu0 0.0
        %1537 = vmatpush1.msra.mxu0 0.0
        %1538 = vmatprep.mubr.f32.mxu0 0.0
        %1539 = vmatmul.mubr.f32.gmra.mrb[0].mxu0 %v1460
        %v1540 = vpop.f32.mrb[0].mxu0
        %v1541 = vadd.f32 0.0, %v1540
        %v1542 = vpop.f32.mrb[0].mxu0
        %v1543 = vadd.f32 0.0, %v1542
        %1544 = vdwg.mxu0
        %1545 = vmatprep.subr.mxu0 %v1472
        %1546 = vmatpush1.msra.mxu0 %v1469
        %1547 = vmatprep.subr.mxu0 0.0
        %1548 = vmatpush1.msra.mxu0 0.0
        %1549 = vmatprep.subr.mxu0 0.0
        %1550 = vmatpush1.msra.mxu0 0.0
        %1551 = vmatprep.subr.mxu0 0.0
        %1552 = vmatpush1.msra.mxu0 0.0
        %1553 = vmatprep.subr.mxu0 0.0
        %1554 = vmatpush1.msra.mxu0 0.0
        %1555 = vmatprep.subr.mxu0 0.0
        %1556 = vmatpush1.msra.mxu0 0.0
        %1557 = vmatprep.subr.mxu0 0.0
        %1558 = vmatpush1.msra.mxu0 0.0
        %1559 = vmatprep.subr.mxu0 0.0
        %1560 = vmatpush1.msra.mxu0 0.0
        %1561 = vmatprep.subr.mxu0 0.0
        %1562 = vmatpush1.msra.mxu0 0.0
        %1563 = vmatprep.subr.mxu0 0.0
        %1564 = vmatpush1.msra.mxu0 0.0
        %1565 = vmatprep.subr.mxu0 0.0
        %1566 = vmatpush1.msra.mxu0 0.0
        %1567 = vmatprep.subr.mxu0 0.0
        %1568 = vmatpush1.msra.mxu0 0.0
        %1569 = vmatprep.subr.mxu0 0.0
        %1570 = vmatpush1.msra.mxu0 0.0
        %1571 = vmatprep.subr.mxu0 0.0
        %1572 = vmatpush1.msra.mxu0 0.0
        %1573 = vmatprep.subr.mxu0 0.0
        %1574 = vmatpush1.msra.mxu0 0.0
        %1575 = vmatprep.subr.mxu0 0.0
        %1576 = vmatpush1.msra.mxu0 0.0
        %1577 = vmatprep.subr.mxu0 0.0
        %1578 = vmatpush1.msra.mxu0 0.0
        %1579 = vmatprep.subr.mxu0 0.0
        %1580 = vmatpush1.msra.mxu0 0.0
        %1581 = vmatprep.subr.mxu0 0.0
        %1582 = vmatpush1.msra.mxu0 0.0
        %1583 = vmatprep.subr.mxu0 0.0
        %1584 = vmatpush1.msra.mxu0 0.0
        %1585 = vmatprep.subr.mxu0 0.0
        %1586 = vmatpush1.msra.mxu0 0.0
        %1587 = vmatprep.subr.mxu0 0.0
        %1588 = vmatpush1.msra.mxu0 0.0
        %1589 = vmatprep.subr.mxu0 0.0
        %1590 = vmatpush1.msra.mxu0 0.0
        %1591 = vmatprep.subr.mxu0 0.0
        %1592 = vmatpush1.msra.mxu0 0.0
        %1593 = vmatprep.subr.mxu0 0.0
        %1594 = vmatpush1.msra.mxu0 0.0
        %1595 = vmatprep.subr.mxu0 0.0
        %1596 = vmatpush1.msra.mxu0 0.0
        %1597 = vmatprep.subr.mxu0 0.0
        %1598 = vmatpush1.msra.mxu0 0.0
        %1599 = vmatprep.subr.mxu0 0.0
        %1600 = vmatpush1.msra.mxu0 0.0
        %1601 = vmatprep.subr.mxu0 0.0
        %1602 = vmatpush1.msra.mxu0 0.0
        %1603 = vmatprep.subr.mxu0 0.0
        %1604 = vmatpush1.msra.mxu0 0.0
        %1605 = vmatprep.subr.mxu0 0.0
        %1606 = vmatpush1.msra.mxu0 0.0
        %1607 = vmatprep.subr.mxu0 0.0
        %1608 = vmatpush1.msra.mxu0 0.0
        %1609 = vmatprep.mubr.f32.mxu0 0.0
        %1610 = vmatmul.mubr.f32.gmra.mrb[0].mxu0 %v1460
        %v1611 = vpop.f32.mrb[0].mxu0
        %v1612 = vadd.f32 0.0, %v1611
        %v1613 = vpop.f32.mrb[0].mxu0
        %v1614 = vadd.f32 0.0, %v1613
        %1615 = vdwg.mxu0
        %v1616 = vadd.f32 %v1413, %v1541
        %v1617 = vadd.f32 %v1414, %v1543
        %v1618 = vadd.f32 %v1415, %v1612
        %v1619 = vadd.f32 %v1416, %v1614
        %1620 = vrot.lane.b32.xlu0 %v241, 112
        %v1621 = vpop.permute.xlu0 %1620
        %1622 = vrot.lane.b32.xlu0 %v245, 112
        %v1623 = vpop.permute.xlu0 %1622
        %1624 = vrot.lane.b32.xlu0 %v242, 112
        %v1625 = vpop.permute.xlu0 %1624
        %1626 = vrot.lane.b32.xlu0 %v246, 112
        %v1627 = vpop.permute.xlu0 %1626
        %vm1628 = vcmp.lt.s32.totalorder %v258, 112
        %v1629 = vsel %vm1628, %v1625, %v1627
        %v1630 = vsel %vm1628, %v1623, %v1625
        %v1631 = vsel %vm1628, %v1621, %v1623
        %v1632 = vsel %vm1628, %v1627, %v1621
        %s1633 = scalar_lea.vmem %s3, 28
        %v1634 = vld [vmem:[%s1633] sm:$0xf]
        %v1636 = vlaneseq
        %v1637 = vshrl.u32 %v1636, 7
        %v1638 = vsub.s32 0, %v1637
        %v1639 = vrot.slane %v1634, %v1638
        %v1640 = vlaneseq
        %v1641 = vshrl.u32 %v1640, 7
        %v1642 = vsub.s32 1, %v1641
        %v1643 = vrot.slane %v1634, %v1642
        %v1644 = vlaneseq
        %v1645 = vshrl.u32 %v1644, 7
        %v1646 = vsub.s32 2, %v1645
        %v1647 = vrot.slane %v1634, %v1646
        %v1648 = vlaneseq
        %v1649 = vshrl.u32 %v1648, 7
        %v1650 = vsub.s32 3, %v1649
        %v1651 = vrot.slane %v1634, %v1650
        %v1656 = vmul.f32 %v1631, %v1639
        %v1657 = vmul.f32 %v1630, %v1643
        %v1658 = vmul.f32 %v1629, %v1647
        %v1659 = vmul.f32 %v1632, %v1651
        %s1660 = scalar_lea.vmem %s1, 56
        %v1661 = vld [vmem:[%s1660] sm:$0xff]
        %v1663 = vsel %vm333, %v1661, 0
        %v1666 = vsel %vm337, %v1656, 0
        %v1669 = vsel %vm337, %v1657, 0
        %v1672 = vsel %vm337, %v1658, 0
        %v1675 = vsel %vm337, %v1659, 0
        %1677 = vmatprep.subr.mxu0 %v1669
        %1678 = vmatpush1.msra.mxu0 %v1666
        %1679 = vmatprep.subr.mxu0 0.0
        %1680 = vmatpush1.msra.mxu0 0.0
        %1681 = vmatprep.subr.mxu0 0.0
        %1682 = vmatpush1.msra.mxu0 0.0
        %1683 = vmatprep.subr.mxu0 0.0
        %1684 = vmatpush1.msra.mxu0 0.0
        %1685 = vmatprep.subr.mxu0 0.0
        %1686 = vmatpush1.msra.mxu0 0.0
        %1687 = vmatprep.subr.mxu0 0.0
        %1688 = vmatpush1.msra.mxu0 0.0
        %1689 = vmatprep.subr.mxu0 0.0
        %1690 = vmatpush1.msra.mxu0 0.0
        %1691 = vmatprep.subr.mxu0 0.0
        %1692 = vmatpush1.msra.mxu0 0.0
        %1693 = vmatprep.subr.mxu0 0.0
        %1694 = vmatpush1.msra.mxu0 0.0
        %1695 = vmatprep.subr.mxu0 0.0
        %1696 = vmatpush1.msra.mxu0 0.0
        %1697 = vmatprep.subr.mxu0 0.0
        %1698 = vmatpush1.msra.mxu0 0.0
        %1699 = vmatprep.subr.mxu0 0.0
        %1700 = vmatpush1.msra.mxu0 0.0
        %1701 = vmatprep.subr.mxu0 0.0
        %1702 = vmatpush1.msra.mxu0 0.0
        %1703 = vmatprep.subr.mxu0 0.0
        %1704 = vmatpush1.msra.mxu0 0.0
        %1705 = vmatprep.subr.mxu0 0.0
        %1706 = vmatpush1.msra.mxu0 0.0
        %1707 = vmatprep.subr.mxu0 0.0
        %1708 = vmatpush1.msra.mxu0 0.0
        %1709 = vmatprep.subr.mxu0 0.0
        %1710 = vmatpush1.msra.mxu0 0.0
        %1711 = vmatprep.subr.mxu0 0.0
        %1712 = vmatpush1.msra.mxu0 0.0
        %1713 = vmatprep.subr.mxu0 0.0
        %1714 = vmatpush1.msra.mxu0 0.0
        %1715 = vmatprep.subr.mxu0 0.0
        %1716 = vmatpush1.msra.mxu0 0.0
        %1717 = vmatprep.subr.mxu0 0.0
        %1718 = vmatpush1.msra.mxu0 0.0
        %1719 = vmatprep.subr.mxu0 0.0
        %1720 = vmatpush1.msra.mxu0 0.0
        %1721 = vmatprep.subr.mxu0 0.0
        %1722 = vmatpush1.msra.mxu0 0.0
        %1723 = vmatprep.subr.mxu0 0.0
        %1724 = vmatpush1.msra.mxu0 0.0
        %1725 = vmatprep.subr.mxu0 0.0
        %1726 = vmatpush1.msra.mxu0 0.0
        %1727 = vmatprep.subr.mxu0 0.0
        %1728 = vmatpush1.msra.mxu0 0.0
        %1729 = vmatprep.subr.mxu0 0.0
        %1730 = vmatpush1.msra.mxu0 0.0
        %1731 = vmatprep.subr.mxu0 0.0
        %1732 = vmatpush1.msra.mxu0 0.0
        %1733 = vmatprep.subr.mxu0 0.0
        %1734 = vmatpush1.msra.mxu0 0.0
        %1735 = vmatprep.subr.mxu0 0.0
        %1736 = vmatpush1.msra.mxu0 0.0
        %1737 = vmatprep.subr.mxu0 0.0
        %1738 = vmatpush1.msra.mxu0 0.0
        %1739 = vmatprep.subr.mxu0 0.0
        %1740 = vmatpush1.msra.mxu0 0.0
        %1741 = vmatprep.mubr.f32.mxu0 0.0
        %1742 = vmatmul.mubr.f32.gmra.mrb[0].mxu0 %v1663
        %v1743 = vpop.f32.mrb[0].mxu0
        %v1744 = vadd.f32 0.0, %v1743
        %v1745 = vpop.f32.mrb[0].mxu0
        %v1746 = vadd.f32 0.0, %v1745
        %1747 = vdwg.mxu0
        %1748 = vmatprep.subr.mxu0 %v1675
        %1749 = vmatpush1.msra.mxu0 %v1672
        %1750 = vmatprep.subr.mxu0 0.0
        %1751 = vmatpush1.msra.mxu0 0.0
        %1752 = vmatprep.subr.mxu0 0.0
        %1753 = vmatpush1.msra.mxu0 0.0
        %1754 = vmatprep.subr.mxu0 0.0
        %1755 = vmatpush1.msra.mxu0 0.0
        %1756 = vmatprep.subr.mxu0 0.0
        %1757 = vmatpush1.msra.mxu0 0.0
        %1758 = vmatprep.subr.mxu0 0.0
        %1759 = vmatpush1.msra.mxu0 0.0
        %1760 = vmatprep.subr.mxu0 0.0
        %1761 = vmatpush1.msra.mxu0 0.0
        %1762 = vmatprep.subr.mxu0 0.0
        %1763 = vmatpush1.msra.mxu0 0.0
        %1764 = vmatprep.subr.mxu0 0.0
        %1765 = vmatpush1.msra.mxu0 0.0
        %1766 = vmatprep.subr.mxu0 0.0
        %1767 = vmatpush1.msra.mxu0 0.0
        %1768 = vmatprep.subr.mxu0 0.0
        %1769 = vmatpush1.msra.mxu0 0.0
        %1770 = vmatprep.subr.mxu0 0.0
        %1771 = vmatpush1.msra.mxu0 0.0
        %1772 = vmatprep.subr.mxu0 0.0
        %1773 = vmatpush1.msra.mxu0 0.0
        %1774 = vmatprep.subr.mxu0 0.0
        %1775 = vmatpush1.msra.mxu0 0.0
        %1776 = vmatprep.subr.mxu0 0.0
        %1777 = vmatpush1.msra.mxu0 0.0
        %1778 = vmatprep.subr.mxu0 0.0
        %1779 = vmatpush1.msra.mxu0 0.0
        %1780 = vmatprep.subr.mxu0 0.0
        %1781 = vmatpush1.msra.mxu0 0.0
        %1782 = vmatprep.subr.mxu0 0.0
        %1783 = vmatpush1.msra.mxu0 0.0
        %1784 = vmatprep.subr.mxu0 0.0
        %1785 = vmatpush1.msra.mxu0 0.0
        %1786 = vmatprep.subr.mxu0 0.0
        %1787 = vmatpush1.msra.mxu0 0.0
        %1788 = vmatprep.subr.mxu0 0.0
        %1789 = vmatpush1.msra.mxu0 0.0
        %1790 = vmatprep.subr.mxu0 0.0
        %1791 = vmatpush1.msra.mxu0 0.0
        %1792 = vmatprep.subr.mxu0 0.0
        %1793 = vmatpush1.msra.mxu0 0.0
        %1794 = vmatprep.subr.mxu0 0.0
        %1795 = vmatpush1.msra.mxu0 0.0
        %1796 = vmatprep.subr.mxu0 0.0
        %1797 = vmatpush1.msra.mxu0 0.0
        %1798 = vmatprep.subr.mxu0 0.0
        %1799 = vmatpush1.msra.mxu0 0.0
        %1800 = vmatprep.subr.mxu0 0.0
        %1801 = vmatpush1.msra.mxu0 0.0
        %1802 = vmatprep.subr.mxu0 0.0
        %1803 = vmatpush1.msra.mxu0 0.0
        %1804 = vmatprep.subr.mxu0 0.0
        %1805 = vmatpush1.msra.mxu0 0.0
        %1806 = vmatprep.subr.mxu0 0.0
        %1807 = vmatpush1.msra.mxu0 0.0
        %1808 = vmatprep.subr.mxu0 0.0
        %1809 = vmatpush1.msra.mxu0 0.0
        %1810 = vmatprep.subr.mxu0 0.0
        %1811 = vmatpush1.msra.mxu0 0.0
        %1812 = vmatprep.mubr.f32.mxu0 0.0
        %1813 = vmatmul.mubr.f32.gmra.mrb[0].mxu0 %v1663
        %v1814 = vpop.f32.mrb[0].mxu0
        %v1815 = vadd.f32 0.0, %v1814
        %v1816 = vpop.f32.mrb[0].mxu0
        %v1817 = vadd.f32 0.0, %v1816
        %1818 = vdwg.mxu0
        %v1819 = vadd.f32 %v1616, %v1744
        %v1820 = vadd.f32 %v1617, %v1746
        %v1821 = vadd.f32 %v1618, %v1815
        %v1822 = vadd.f32 %v1619, %v1817
        %1823 = vrot.lane.b32.xlu0 %v241, 111
        %v1824 = vpop.permute.xlu0 %1823
        %1825 = vrot.lane.b32.xlu0 %v245, 111
        %v1826 = vpop.permute.xlu0 %1825
        %1827 = vrot.lane.b32.xlu0 %v242, 111
        %v1828 = vpop.permute.xlu0 %1827
        %1829 = vrot.lane.b32.xlu0 %v246, 111
        %v1830 = vpop.permute.xlu0 %1829
        %vm1831 = vcmp.lt.s32.totalorder %v258, 111
        %v1832 = vsel %vm1831, %v1828, %v1830
        %v1833 = vsel %vm1831, %v1826, %v1828
        %v1834 = vsel %vm1831, %v1824, %v1826
        %v1835 = vsel %vm1831, %v1830, %v1824
        %s1836 = scalar_lea.vmem %s3, 32
        %v1837 = vld [vmem:[%s1836] sm:$0xf]
        %v1839 = vlaneseq
        %v1840 = vshrl.u32 %v1839, 7
        %v1841 = vsub.s32 0, %v1840
        %v1842 = vrot.slane %v1837, %v1841
        %v1843 = vlaneseq
        %v1844 = vshrl.u32 %v1843, 7
        %v1845 = vsub.s32 1, %v1844
        %v1846 = vrot.slane %v1837, %v1845
        %v1847 = vlaneseq
        %v1848 = vshrl.u32 %v1847, 7
        %v1849 = vsub.s32 2, %v1848
        %v1850 = vrot.slane %v1837, %v1849
        %v1851 = vlaneseq
        %v1852 = vshrl.u32 %v1851, 7
        %v1853 = vsub.s32 3, %v1852
        %v1854 = vrot.slane %v1837, %v1853
        %v1859 = vmul.f32 %v1834, %v1842
        %v1860 = vmul.f32 %v1833, %v1846
        %v1861 = vmul.f32 %v1832, %v1850
        %v1862 = vmul.f32 %v1835, %v1854
        %s1863 = scalar_lea.vmem %s1, 64
        %v1864 = vld [vmem:[%s1863] sm:$0xff]
        %v1866 = vsel %vm333, %v1864, 0
        %v1869 = vsel %vm337, %v1859, 0
        %v1872 = vsel %vm337, %v1860, 0
        %v1875 = vsel %vm337, %v1861, 0
        %v1878 = vsel %vm337, %v1862, 0
        %1880 = vmatprep.subr.mxu0 %v1872
        %1881 = vmatpush1.msra.mxu0 %v1869
        %1882 = vmatprep.subr.mxu0 0.0
        %1883 = vmatpush1.msra.mxu0 0.0
        %1884 = vmatprep.subr.mxu0 0.0
        %1885 = vmatpush1.msra.mxu0 0.0
        %1886 = vmatprep.subr.mxu0 0.0
        %1887 = vmatpush1.msra.mxu0 0.0
        %1888 = vmatprep.subr.mxu0 0.0
        %1889 = vmatpush1.msra.mxu0 0.0
        %1890 = vmatprep.subr.mxu0 0.0
        %1891 = vmatpush1.msra.mxu0 0.0
        %1892 = vmatprep.subr.mxu0 0.0
        %1893 = vmatpush1.msra.mxu0 0.0
        %1894 = vmatprep.subr.mxu0 0.0
        %1895 = vmatpush1.msra.mxu0 0.0
        %1896 = vmatprep.subr.mxu0 0.0
        %1897 = vmatpush1.msra.mxu0 0.0
        %1898 = vmatprep.subr.mxu0 0.0
        %1899 = vmatpush1.msra.mxu0 0.0
        %1900 = vmatprep.subr.mxu0 0.0
        %1901 = vmatpush1.msra.mxu0 0.0
        %1902 = vmatprep.subr.mxu0 0.0
        %1903 = vmatpush1.msra.mxu0 0.0
        %1904 = vmatprep.subr.mxu0 0.0
        %1905 = vmatpush1.msra.mxu0 0.0
        %1906 = vmatprep.subr.mxu0 0.0
        %1907 = vmatpush1.msra.mxu0 0.0
        %1908 = vmatprep.subr.mxu0 0.0
        %1909 = vmatpush1.msra.mxu0 0.0
        %1910 = vmatprep.subr.mxu0 0.0
        %1911 = vmatpush1.msra.mxu0 0.0
        %1912 = vmatprep.subr.mxu0 0.0
        %1913 = vmatpush1.msra.mxu0 0.0
        %1914 = vmatprep.subr.mxu0 0.0
        %1915 = vmatpush1.msra.mxu0 0.0
        %1916 = vmatprep.subr.mxu0 0.0
        %1917 = vmatpush1.msra.mxu0 0.0
        %1918 = vmatprep.subr.mxu0 0.0
        %1919 = vmatpush1.msra.mxu0 0.0
        %1920 = vmatprep.subr.mxu0 0.0
        %1921 = vmatpush1.msra.mxu0 0.0
        %1922 = vmatprep.subr.mxu0 0.0
        %1923 = vmatpush1.msra.mxu0 0.0
        %1924 = vmatprep.subr.mxu0 0.0
        %1925 = vmatpush1.msra.mxu0 0.0
        %1926 = vmatprep.subr.mxu0 0.0
        %1927 = vmatpush1.msra.mxu0 0.0
        %1928 = vmatprep.subr.mxu0 0.0
        %1929 = vmatpush1.msra.mxu0 0.0
        %1930 = vmatprep.subr.mxu0 0.0
        %1931 = vmatpush1.msra.mxu0 0.0
        %1932 = vmatprep.subr.mxu0 0.0
        %1933 = vmatpush1.msra.mxu0 0.0
        %1934 = vmatprep.subr.mxu0 0.0
        %1935 = vmatpush1.msra.mxu0 0.0
        %1936 = vmatprep.subr.mxu0 0.0
        %1937 = vmatpush1.msra.mxu0 0.0
        %1938 = vmatprep.subr.mxu0 0.0
        %1939 = vmatpush1.msra.mxu0 0.0
        %1940 = vmatprep.subr.mxu0 0.0
        %1941 = vmatpush1.msra.mxu0 0.0
        %1942 = vmatprep.subr.mxu0 0.0
        %1943 = vmatpush1.msra.mxu0 0.0
        %1944 = vmatprep.mubr.f32.mxu0 0.0
        %1945 = vmatmul.mubr.f32.gmra.mrb[0].mxu0 %v1866
        %v1946 = vpop.f32.mrb[0].mxu0
        %v1947 = vadd.f32 0.0, %v1946
        %v1948 = vpop.f32.mrb[0].mxu0
        %v1949 = vadd.f32 0.0, %v1948
        %1950 = vdwg.mxu0
        %1951 = vmatprep.subr.mxu0 %v1878
        %1952 = vmatpush1.msra.mxu0 %v1875
        %1953 = vmatprep.subr.mxu0 0.0
        %1954 = vmatpush1.msra.mxu0 0.0
        %1955 = vmatprep.subr.mxu0 0.0
        %1956 = vmatpush1.msra.mxu0 0.0
        %1957 = vmatprep.subr.mxu0 0.0
        %1958 = vmatpush1.msra.mxu0 0.0
        %1959 = vmatprep.subr.mxu0 0.0
        %1960 = vmatpush1.msra.mxu0 0.0
        %1961 = vmatprep.subr.mxu0 0.0
        %1962 = vmatpush1.msra.mxu0 0.0
        %1963 = vmatprep.subr.mxu0 0.0
        %1964 = vmatpush1.msra.mxu0 0.0
        %1965 = vmatprep.subr.mxu0 0.0
        %1966 = vmatpush1.msra.mxu0 0.0
        %1967 = vmatprep.subr.mxu0 0.0
        %1968 = vmatpush1.msra.mxu0 0.0
        %1969 = vmatprep.subr.mxu0 0.0
        %1970 = vmatpush1.msra.mxu0 0.0
        %1971 = vmatprep.subr.mxu0 0.0
        %1972 = vmatpush1.msra.mxu0 0.0
        %1973 = vmatprep.subr.mxu0 0.0
        %1974 = vmatpush1.msra.mxu0 0.0
        %1975 = vmatprep.subr.mxu0 0.0
        %1976 = vmatpush1.msra.mxu0 0.0
        %1977 = vmatprep.subr.mxu0 0.0
        %1978 = vmatpush1.msra.mxu0 0.0
        %1979 = vmatprep.subr.mxu0 0.0
        %1980 = vmatpush1.msra.mxu0 0.0
        %1981 = vmatprep.subr.mxu0 0.0
        %1982 = vmatpush1.msra.mxu0 0.0
        %1983 = vmatprep.subr.mxu0 0.0
        %1984 = vmatpush1.msra.mxu0 0.0
        %1985 = vmatprep.subr.mxu0 0.0
        %1986 = vmatpush1.msra.mxu0 0.0
        %1987 = vmatprep.subr.mxu0 0.0
        %1988 = vmatpush1.msra.mxu0 0.0
        %1989 = vmatprep.subr.mxu0 0.0
        %1990 = vmatpush1.msra.mxu0 0.0
        %1991 = vmatprep.subr.mxu0 0.0
        %1992 = vmatpush1.msra.mxu0 0.0
        %1993 = vmatprep.subr.mxu0 0.0
        %1994 = vmatpush1.msra.mxu0 0.0
        %1995 = vmatprep.subr.mxu0 0.0
        %1996 = vmatpush1.msra.mxu0 0.0
        %1997 = vmatprep.subr.mxu0 0.0
        %1998 = vmatpush1.msra.mxu0 0.0
        %1999 = vmatprep.subr.mxu0 0.0
        %2000 = vmatpush1.msra.mxu0 0.0
        %2001 = vmatprep.subr.mxu0 0.0
        %2002 = vmatpush1.msra.mxu0 0.0
        %2003 = vmatprep.subr.mxu0 0.0
        %2004 = vmatpush1.msra.mxu0 0.0
        %2005 = vmatprep.subr.mxu0 0.0
        %2006 = vmatpush1.msra.mxu0 0.0
        %2007 = vmatprep.subr.mxu0 0.0
        %2008 = vmatpush1.msra.mxu0 0.0
        %2009 = vmatprep.subr.mxu0 0.0
        %2010 = vmatpush1.msra.mxu0 0.0
        %2011 = vmatprep.subr.mxu0 0.0
        %2012 = vmatpush1.msra.mxu0 0.0
        %2013 = vmatprep.subr.mxu0 0.0
        %2014 = vmatpush1.msra.mxu0 0.0
        %2015 = vmatprep.mubr.f32.mxu0 0.0
        %2016 = vmatmul.mubr.f32.gmra.mrb[0].mxu0 %v1866
        %v2017 = vpop.f32.mrb[0].mxu0
        %v2018 = vadd.f32 0.0, %v2017
        %v2019 = vpop.f32.mrb[0].mxu0
        %v2020 = vadd.f32 0.0, %v2019
        %2021 = vdwg.mxu0
        %v2022 = vadd.f32 %v1819, %v1947
        %v2023 = vadd.f32 %v1820, %v1949
        %v2024 = vadd.f32 %v1821, %v2018
        %v2025 = vadd.f32 %v1822, %v2020
        %v2026 = vld [vmem:[%s2] sm:$0xff]
        %2028 = vset.pattern.permute.xlu0 0
        %2029 = vperm.xlu0 %2028, %v2026
        %v2030 = vpop.permute.xlu0 %2029
        %v2032 = vadd.f32 %v2022, %v2030
        %v2033 = vadd.f32 %v2023, %v2030
        %v2034 = vadd.f32 %v2024, %v2030
        %v2035 = vadd.f32 %v2025, %v2030
        %v2036 = vmax.f32 %v2032, 0.0
        %v2037 = vmax.f32 %v2033, 0.0
        %v2038 = vmax.f32 %v2034, 0.0
        %v2039 = vmax.f32 %v2035, 0.0
        %v2040 = vld [vmem:[#allocation2] sm:$0xff]
        %v2041 = vld [vmem:[#allocation2 + $0x8] sm:$0xff]
        %v2042 = vld [vmem:[#allocation2 + $0x10] sm:$0xff]
        %v2043 = vld [vmem:[#allocation2 + $0x18] sm:$0xff]
        %v2044 = vld [vmem:[#allocation2 + $0x20] sm:$0xff]
        %v2045 = vld [vmem:[#allocation2 + $0x28] sm:$0xff]
        %v2046 = vld [vmem:[#allocation2 + $0x30] sm:$0xff]
        %v2047 = vld [vmem:[#allocation2 + $0x38] sm:$0xff]
        %v2048 = vld [vmem:[#allocation2 + $0x40] sm:$0xff]
        %v2049 = vld [vmem:[#allocation2 + $0x48] sm:$0xff]
        %v2050 = vld [vmem:[#allocation2 + $0x50] sm:$0xff]
        %v2051 = vld [vmem:[#allocation2 + $0x58] sm:$0xff]
        %v2052 = vld [vmem:[#allocation2 + $0x60] sm:$0xff]
        %v2053 = vld [vmem:[#allocation2 + $0x68] sm:$0xff]
        %v2054 = vld [vmem:[#allocation2 + $0x70] sm:$0xff]
        %v2055 = vld [vmem:[#allocation2 + $0x78] sm:$0xff]
        %v2056 = vld [vmem:[#allocation2 + $0x80] sm:$0xff]
        %v2057 = vld [vmem:[#allocation2 + $0x88] sm:$0xff]
        %v2058 = vld [vmem:[#allocation2 + $0x90] sm:$0xff]
        %v2059 = vld [vmem:[#allocation2 + $0x98] sm:$0xff]
        %v2060 = vld [vmem:[#allocation2 + $0xa0] sm:$0xff]
        %v2061 = vld [vmem:[#allocation2 + $0xa8] sm:$0xff]
        %v2062 = vld [vmem:[#allocation2 + $0xb0] sm:$0xff]
        %v2063 = vld [vmem:[#allocation2 + $0xb8] sm:$0xff]
        %v2064 = vld [vmem:[#allocation2 + $0xc0] sm:$0xff]
        %v2065 = vld [vmem:[#allocation2 + $0xc8] sm:$0xff]
        %v2066 = vld [vmem:[#allocation2 + $0xd0] sm:$0xff]
        %v2067 = vld [vmem:[#allocation2 + $0xd8] sm:$0xff]
        %v2068 = vld [vmem:[#allocation2 + $0xe0] sm:$0xff]
        %v2069 = vld [vmem:[#allocation2 + $0xe8] sm:$0xff]
        %v2070 = vld [vmem:[#allocation2 + $0xf0] sm:$0xff]
        %v2071 = vld [vmem:[#allocation2 + $0xf8] sm:$0xff]
        %v2072 = vld [vmem:[#allocation2 + $0x100] sm:$0xff]
        %v2073 = vld [vmem:[#allocation2 + $0x108] sm:$0xff]
        %v2074 = vld [vmem:[#allocation2 + $0x110] sm:$0xff]
        %v2075 = vld [vmem:[#allocation2 + $0x118] sm:$0xff]
        %v2076 = vld [vmem:[#allocation2 + $0x120] sm:$0xff]
        %v2077 = vld [vmem:[#allocation2 + $0x128] sm:$0xff]
        %v2078 = vld [vmem:[#allocation2 + $0x130] sm:$0xff]
        %v2079 = vld [vmem:[#allocation2 + $0x138] sm:$0xff]
        %v2080 = vld [vmem:[#allocation2 + $0x140] sm:$0xff]
        %v2081 = vld [vmem:[#allocation2 + $0x148] sm:$0xff]
        %v2082 = vld [vmem:[#allocation2 + $0x150] sm:$0xff]
        %v2083 = vld [vmem:[#allocation2 + $0x158] sm:$0xff]
        %v2084 = vld [vmem:[#allocation2 + $0x160] sm:$0xff]
        %v2085 = vld [vmem:[#allocation2 + $0x168] sm:$0xff]
        %v2086 = vld [vmem:[#allocation2 + $0x170] sm:$0xff]
        %v2087 = vld [vmem:[#allocation2 + $0x178] sm:$0xff]
        %v2088 = vld [vmem:[#allocation2 + $0x180] sm:$0xff]
        %v2089 = vld [vmem:[#allocation2 + $0x188] sm:$0xff]
        %v2090 = vld [vmem:[#allocation2 + $0x190] sm:$0xff]
        %v2091 = vld [vmem:[#allocation2 + $0x198] sm:$0xff]
        %v2092 = vld [vmem:[#allocation2 + $0x1a0] sm:$0xff]
        %v2093 = vld [vmem:[#allocation2 + $0x1a8] sm:$0xff]
        %v2094 = vld [vmem:[#allocation2 + $0x1b0] sm:$0xff]
        %v2095 = vld [vmem:[#allocation2 + $0x1b8] sm:$0xff]
        %v2096 = vld [vmem:[#allocation2 + $0x1c0] sm:$0xff]
        %v2097 = vld [vmem:[#allocation2 + $0x1c8] sm:$0xff]
        %v2098 = vld [vmem:[#allocation2 + $0x1d0] sm:$0xff]
        %v2099 = vld [vmem:[#allocation2 + $0x1d8] sm:$0xff]
        %v2100 = vld [vmem:[#allocation2 + $0x1e0] sm:$0xff]
        %v2101 = vld [vmem:[#allocation2 + $0x1e8] sm:$0xff]
        %v2102 = vld [vmem:[#allocation2 + $0x1f0] sm:$0xff]
        %v2103 = vld [vmem:[#allocation2 + $0x1f8] sm:$0xff]
        %v2104 = vld [vmem:[#allocation2 + $0x200] sm:$0xff]
        %v2105 = vld [vmem:[#allocation2 + $0x208] sm:$0xff]
        %v2106 = vld [vmem:[#allocation2 + $0x210] sm:$0xff]
        %v2107 = vld [vmem:[#allocation2 + $0x218] sm:$0xff]
        %v2108 = vld [vmem:[#allocation2 + $0x220] sm:$0xff]
        %v2109 = vld [vmem:[#allocation2 + $0x228] sm:$0xff]
        %v2110 = vld [vmem:[#allocation2 + $0x230] sm:$0xff]
        %v2111 = vld [vmem:[#allocation2 + $0x238] sm:$0xff]
        %v2112 = vld [vmem:[#allocation2 + $0x240] sm:$0xff]
        %v2113 = vld [vmem:[#allocation2 + $0x248] sm:$0xff]
        %v2114 = vld [vmem:[#allocation2 + $0x250] sm:$0xff]
        %v2115 = vld [vmem:[#allocation2 + $0x258] sm:$0xff]
        %v2116 = vld [vmem:[#allocation2 + $0x260] sm:$0xff]
        %v2117 = vld [vmem:[#allocation2 + $0x268] sm:$0xff]
        %v2118 = vld [vmem:[#allocation2 + $0x270] sm:$0xff]
        %v2119 = vld [vmem:[#allocation2 + $0x278] sm:$0xff]
        %v2120 = vld [vmem:[#allocation2 + $0x280] sm:$0xff]
        %v2121 = vld [vmem:[#allocation2 + $0x288] sm:$0xff]
        %v2122 = vld [vmem:[#allocation2 + $0x290] sm:$0xff]
        %v2123 = vld [vmem:[#allocation2 + $0x298] sm:$0xff]
        %v2124 = vld [vmem:[#allocation2 + $0x2a0] sm:$0xff]
        %v2125 = vld [vmem:[#allocation2 + $0x2a8] sm:$0xff]
        %v2126 = vld [vmem:[#allocation2 + $0x2b0] sm:$0xff]
        %v2127 = vld [vmem:[#allocation2 + $0x2b8] sm:$0xff]
        %v2128 = vld [vmem:[#allocation2 + $0x2c0] sm:$0xff]
        %v2129 = vld [vmem:[#allocation2 + $0x2c8] sm:$0xff]
        %v2130 = vld [vmem:[#allocation2 + $0x2d0] sm:$0xff]
        %v2131 = vld [vmem:[#allocation2 + $0x2d8] sm:$0xff]
        %v2132 = vld [vmem:[#allocation2 + $0x2e0] sm:$0xff]
        %v2133 = vld [vmem:[#allocation2 + $0x2e8] sm:$0xff]
        %v2134 = vld [vmem:[#allocation2 + $0x2f0] sm:$0xff]
        %v2135 = vld [vmem:[#allocation2 + $0x2f8] sm:$0xff]
        %v2136 = vld [vmem:[#allocation2 + $0x300] sm:$0xff]
        %v2137 = vld [vmem:[#allocation2 + $0x308] sm:$0xff]
        %v2138 = vld [vmem:[#allocation2 + $0x310] sm:$0xff]
        %v2139 = vld [vmem:[#allocation2 + $0x318] sm:$0xff]
        %v2140 = vld [vmem:[#allocation2 + $0x320] sm:$0xff]
        %v2141 = vld [vmem:[#allocation2 + $0x328] sm:$0xff]
        %v2142 = vld [vmem:[#allocation2 + $0x330] sm:$0xff]
        %v2143 = vld [vmem:[#allocation2 + $0x338] sm:$0xff]
        %v2144 = vld [vmem:[#allocation2 + $0x340] sm:$0xff]
        %v2145 = vld [vmem:[#allocation2 + $0x348] sm:$0xff]
        %v2146 = vld [vmem:[#allocation2 + $0x350] sm:$0xff]
        %v2147 = vld [vmem:[#allocation2 + $0x358] sm:$0xff]
        %v2148 = vld [vmem:[#allocation2 + $0x360] sm:$0xff]
        %v2149 = vld [vmem:[#allocation2 + $0x368] sm:$0xff]
        %v2150 = vld [vmem:[#allocation2 + $0x370] sm:$0xff]
        %v2151 = vld [vmem:[#allocation2 + $0x378] sm:$0xff]
        %v2152 = vld [vmem:[#allocation2 + $0x380] sm:$0xff]
        %v2153 = vld [vmem:[#allocation2 + $0x388] sm:$0xff]
        %v2154 = vld [vmem:[#allocation2 + $0x390] sm:$0xff]
        %v2155 = vld [vmem:[#allocation2 + $0x398] sm:$0xff]
        %v2156 = vld [vmem:[#allocation2 + $0x3a0] sm:$0xff]
        %v2157 = vld [vmem:[#allocation2 + $0x3a8] sm:$0xff]
        %v2158 = vld [vmem:[#allocation2 + $0x3b0] sm:$0xff]
        %v2159 = vld [vmem:[#allocation2 + $0x3b8] sm:$0xff]
        %v2160 = vld [vmem:[#allocation2 + $0x3c0] sm:$0xff]
        %v2161 = vld [vmem:[#allocation2 + $0x3c8] sm:$0xff]
        %v2162 = vld [vmem:[#allocation2 + $0x3d0] sm:$0xff]
        %v2163 = vld [vmem:[#allocation2 + $0x3d8] sm:$0xff]
        %v2164 = vld [vmem:[#allocation2 + $0x3e0] sm:$0xff]
        %v2165 = vld [vmem:[#allocation2 + $0x3e8] sm:$0xff]
        %v2166 = vld [vmem:[#allocation2 + $0x3f0] sm:$0xff]
        %v2167 = vld [vmem:[#allocation2 + $0x3f8] sm:$0xff]
        %v2168 = vld [vmem:[#allocation2 + $0x400] sm:$0xff]
        %v2169 = vld [vmem:[#allocation2 + $0x408] sm:$0xff]
        %v2170 = vld [vmem:[#allocation2 + $0x410] sm:$0xff]
        %v2171 = vld [vmem:[#allocation2 + $0x418] sm:$0xff]
        %v2172 = vld [vmem:[#allocation2 + $0x420] sm:$0xff]
        %v2173 = vld [vmem:[#allocation2 + $0x428] sm:$0xff]
        %v2174 = vld [vmem:[#allocation2 + $0x430] sm:$0xff]
        %v2175 = vld [vmem:[#allocation2 + $0x438] sm:$0xff]
        %v2176 = vld [vmem:[#allocation2 + $0x440] sm:$0xff]
        %v2177 = vld [vmem:[#allocation2 + $0x448] sm:$0xff]
        %v2178 = vld [vmem:[#allocation2 + $0x450] sm:$0xff]
        %v2179 = vld [vmem:[#allocation2 + $0x458] sm:$0xff]
        %v2180 = vld [vmem:[#allocation2 + $0x460] sm:$0xff]
        %v2181 = vld [vmem:[#allocation2 + $0x468] sm:$0xff]
        %v2182 = vld [vmem:[#allocation2 + $0x470] sm:$0xff]
        %v2183 = vld [vmem:[#allocation2 + $0x478] sm:$0xff]
        %v2184 = vld [vmem:[#allocation2 + $0x480] sm:$0xff]
        %v2185 = vld [vmem:[#allocation2 + $0x488] sm:$0xff]
        %v2186 = vld [vmem:[#allocation2 + $0x490] sm:$0xff]
        %v2187 = vld [vmem:[#allocation2 + $0x498] sm:$0xff]
        %v2188 = vld [vmem:[#allocation2 + $0x4a0] sm:$0xff]
        %v2189 = vld [vmem:[#allocation2 + $0x4a8] sm:$0xff]
        %v2190 = vld [vmem:[#allocation2 + $0x4b0] sm:$0xff]
        %v2191 = vld [vmem:[#allocation2 + $0x4b8] sm:$0xff]
        %v2192 = vld [vmem:[#allocation2 + $0x4c0] sm:$0xff]
        %v2193 = vld [vmem:[#allocation2 + $0x4c8] sm:$0xff]
        %v2194 = vld [vmem:[#allocation2 + $0x4d0] sm:$0xff]
        %v2195 = vld [vmem:[#allocation2 + $0x4d8] sm:$0xff]
        %v2196 = vld [vmem:[#allocation2 + $0x4e0] sm:$0xff]
        %v2197 = vld [vmem:[#allocation2 + $0x4e8] sm:$0xff]
        %v2198 = vld [vmem:[#allocation2 + $0x4f0] sm:$0xff]
        %v2199 = vld [vmem:[#allocation2 + $0x4f8] sm:$0xff]
        %v2200 = vld [vmem:[#allocation2 + $0x500] sm:$0xff]
        %v2201 = vld [vmem:[#allocation2 + $0x508] sm:$0xff]
        %v2202 = vld [vmem:[#allocation2 + $0x510] sm:$0xff]
        %v2203 = vld [vmem:[#allocation2 + $0x518] sm:$0xff]
        %v2204 = vld [vmem:[#allocation2 + $0x520] sm:$0xff]
        %v2205 = vld [vmem:[#allocation2 + $0x528] sm:$0xff]
        %v2206 = vld [vmem:[#allocation2 + $0x530] sm:$0xff]
        %v2207 = vld [vmem:[#allocation2 + $0x538] sm:$0xff]
        %v2208 = vld [vmem:[#allocation2 + $0x540] sm:$0xff]
        %v2209 = vld [vmem:[#allocation2 + $0x548] sm:$0xff]
        %v2210 = vld [vmem:[#allocation2 + $0x550] sm:$0xff]
        %v2211 = vld [vmem:[#allocation2 + $0x558] sm:$0xff]
        %v2212 = vld [vmem:[#allocation2 + $0x560] sm:$0xff]
        %v2213 = vld [vmem:[#allocation2 + $0x568] sm:$0xff]
        %v2214 = vld [vmem:[#allocation2 + $0x570] sm:$0xff]
        %v2215 = vld [vmem:[#allocation2 + $0x578] sm:$0xff]
        %v2216 = vld [vmem:[#allocation2 + $0x580] sm:$0xff]
        %v2217 = vld [vmem:[#allocation2 + $0x588] sm:$0xff]
        %v2218 = vld [vmem:[#allocation2 + $0x590] sm:$0xff]
        %v2219 = vld [vmem:[#allocation2 + $0x598] sm:$0xff]
        %v2220 = vld [vmem:[#allocation2 + $0x5a0] sm:$0xff]
        %v2221 = vld [vmem:[#allocation2 + $0x5a8] sm:$0xff]
        %v2222 = vld [vmem:[#allocation2 + $0x5b0] sm:$0xff]
        %v2223 = vld [vmem:[#allocation2 + $0x5b8] sm:$0xff]
        %v2224 = vld [vmem:[#allocation2 + $0x5c0] sm:$0xff]
        %v2225 = vld [vmem:[#allocation2 + $0x5c8] sm:$0xff]
        %v2226 = vld [vmem:[#allocation2 + $0x5d0] sm:$0xff]
        %v2227 = vld [vmem:[#allocation2 + $0x5d8] sm:$0xff]
        %v2228 = vld [vmem:[#allocation2 + $0x5e0] sm:$0xff]
        %v2229 = vld [vmem:[#allocation2 + $0x5e8] sm:$0xff]
        %v2230 = vld [vmem:[#allocation2 + $0x5f0] sm:$0xff]
        %v2231 = vld [vmem:[#allocation2 + $0x5f8] sm:$0xff]
        %v2232 = vld [vmem:[#allocation2 + $0x600] sm:$0xff]
        %v2233 = vld [vmem:[#allocation2 + $0x608] sm:$0xff]
        %v2234 = vld [vmem:[#allocation2 + $0x610] sm:$0xff]
        %v2235 = vld [vmem:[#allocation2 + $0x618] sm:$0xff]
        %v2236 = vld [vmem:[#allocation2 + $0x620] sm:$0xff]
        %v2237 = vld [vmem:[#allocation2 + $0x628] sm:$0xff]
        %v2238 = vld [vmem:[#allocation2 + $0x630] sm:$0xff]
        %v2239 = vld [vmem:[#allocation2 + $0x638] sm:$0xff]
        %v2240 = vld [vmem:[#allocation2 + $0x640] sm:$0xff]
        %v2241 = vld [vmem:[#allocation2 + $0x648] sm:$0xff]
        %v2242 = vld [vmem:[#allocation2 + $0x650] sm:$0xff]
        %v2243 = vld [vmem:[#allocation2 + $0x658] sm:$0xff]
        %v2244 = vld [vmem:[#allocation2 + $0x660] sm:$0xff]
        %v2245 = vld [vmem:[#allocation2 + $0x668] sm:$0xff]
        %v2246 = vld [vmem:[#allocation2 + $0x670] sm:$0xff]
        %v2247 = vld [vmem:[#allocation2 + $0x678] sm:$0xff]
        %v2248 = vld [vmem:[#allocation2 + $0x680] sm:$0xff]
        %v2249 = vld [vmem:[#allocation2 + $0x688] sm:$0xff]
        %v2250 = vld [vmem:[#allocation2 + $0x690] sm:$0xff]
        %v2251 = vld [vmem:[#allocation2 + $0x698] sm:$0xff]
        %v2252 = vld [vmem:[#allocation2 + $0x6a0] sm:$0xff]
        %v2253 = vld [vmem:[#allocation2 + $0x6a8] sm:$0xff]
        %v2254 = vld [vmem:[#allocation2 + $0x6b0] sm:$0xff]
        %v2255 = vld [vmem:[#allocation2 + $0x6b8] sm:$0xff]
        %v2256 = vld [vmem:[#allocation2 + $0x6c0] sm:$0xff]
        %v2257 = vld [vmem:[#allocation2 + $0x6c8] sm:$0xff]
        %v2258 = vld [vmem:[#allocation2 + $0x6d0] sm:$0xff]
        %v2259 = vld [vmem:[#allocation2 + $0x6d8] sm:$0xff]
        %v2260 = vld [vmem:[#allocation2 + $0x6e0] sm:$0xff]
        %v2261 = vld [vmem:[#allocation2 + $0x6e8] sm:$0xff]
        %v2262 = vld [vmem:[#allocation2 + $0x6f0] sm:$0xff]
        %v2263 = vld [vmem:[#allocation2 + $0x6f8] sm:$0xff]
        %v2264 = vld [vmem:[#allocation2 + $0x700] sm:$0xff]
        %v2265 = vld [vmem:[#allocation2 + $0x708] sm:$0xff]
        %v2266 = vld [vmem:[#allocation2 + $0x710] sm:$0xff]
        %v2267 = vld [vmem:[#allocation2 + $0x718] sm:$0xff]
        %v2268 = vld [vmem:[#allocation2 + $0x720] sm:$0xff]
        %v2269 = vld [vmem:[#allocation2 + $0x728] sm:$0xff]
        %v2270 = vld [vmem:[#allocation2 + $0x730] sm:$0xff]
        %v2271 = vld [vmem:[#allocation2 + $0x738] sm:$0xff]
        %v2272 = vld [vmem:[#allocation2 + $0x740] sm:$0xff]
        %v2273 = vld [vmem:[#allocation2 + $0x748] sm:$0xff]
        %v2274 = vld [vmem:[#allocation2 + $0x750] sm:$0xff]
        %v2275 = vld [vmem:[#allocation2 + $0x758] sm:$0xff]
        %v2276 = vld [vmem:[#allocation2 + $0x760] sm:$0xff]
        %v2277 = vld [vmem:[#allocation2 + $0x768] sm:$0xff]
        %v2278 = vld [vmem:[#allocation2 + $0x770] sm:$0xff]
        %v2279 = vld [vmem:[#allocation2 + $0x778] sm:$0xff]
        %v2280 = vld [vmem:[#allocation2 + $0x780] sm:$0xff]
        %v2281 = vld [vmem:[#allocation2 + $0x788] sm:$0xff]
        %v2282 = vld [vmem:[#allocation2 + $0x790] sm:$0xff]
        %v2283 = vld [vmem:[#allocation2 + $0x798] sm:$0xff]
        %v2284 = vld [vmem:[#allocation2 + $0x7a0] sm:$0xff]
        %v2285 = vld [vmem:[#allocation2 + $0x7a8] sm:$0xff]
        %v2286 = vld [vmem:[#allocation2 + $0x7b0] sm:$0xff]
        %v2287 = vld [vmem:[#allocation2 + $0x7b8] sm:$0xff]
        %v2288 = vld [vmem:[#allocation2 + $0x7c0] sm:$0xff]
        %v2289 = vld [vmem:[#allocation2 + $0x7c8] sm:$0xff]
        %v2290 = vld [vmem:[#allocation2 + $0x7d0] sm:$0xff]
        %v2291 = vld [vmem:[#allocation2 + $0x7d8] sm:$0xff]
        %v2292 = vld [vmem:[#allocation2 + $0x7e0] sm:$0xff]
        %v2293 = vld [vmem:[#allocation2 + $0x7e8] sm:$0xff]
        %v2294 = vld [vmem:[#allocation2 + $0x7f0] sm:$0xff]
        %v2295 = vld [vmem:[#allocation2 + $0x7f8] sm:$0xff]
        %2296 = vmatprep.subr.mxu0 %v2041
        %2297 = vmatpush1.msra.mxu0 %v2040
        %2298 = vmatprep.subr.mxu0 %v2049
        %2299 = vmatpush1.msra.mxu0 %v2048
        %2300 = vmatprep.subr.mxu0 %v2057
        %2301 = vmatpush1.msra.mxu0 %v2056
        %2302 = vmatprep.subr.mxu0 %v2065
        %2303 = vmatpush1.msra.mxu0 %v2064
        %2304 = vmatprep.subr.mxu0 %v2073
        %2305 = vmatpush1.msra.mxu0 %v2072
        %2306 = vmatprep.subr.mxu0 %v2081
        %2307 = vmatpush1.msra.mxu0 %v2080
        %2308 = vmatprep.subr.mxu0 %v2089
        %2309 = vmatpush1.msra.mxu0 %v2088
        %2310 = vmatprep.subr.mxu0 %v2097
        %2311 = vmatpush1.msra.mxu0 %v2096
        %2312 = vmatprep.subr.mxu0 %v2105
        %2313 = vmatpush1.msra.mxu0 %v2104
        %2314 = vmatprep.subr.mxu0 %v2113
        %2315 = vmatpush1.msra.mxu0 %v2112
        %2316 = vmatprep.subr.mxu0 %v2121
        %2317 = vmatpush1.msra.mxu0 %v2120
        %2318 = vmatprep.subr.mxu0 %v2129
        %2319 = vmatpush1.msra.mxu0 %v2128
        %2320 = vmatprep.subr.mxu0 %v2137
        %2321 = vmatpush1.msra.mxu0 %v2136
        %2322 = vmatprep.subr.mxu0 %v2145
        %2323 = vmatpush1.msra.mxu0 %v2144
        %2324 = vmatprep.subr.mxu0 %v2153
        %2325 = vmatpush1.msra.mxu0 %v2152
        %2326 = vmatprep.subr.mxu0 %v2161
        %2327 = vmatpush1.msra.mxu0 %v2160
        %2328 = vmatprep.subr.mxu0 %v2169
        %2329 = vmatpush1.msra.mxu0 %v2168
        %2330 = vmatprep.subr.mxu0 %v2177
        %2331 = vmatpush1.msra.mxu0 %v2176
        %2332 = vmatprep.subr.mxu0 %v2185
        %2333 = vmatpush1.msra.mxu0 %v2184
        %2334 = vmatprep.subr.mxu0 %v2193
        %2335 = vmatpush1.msra.mxu0 %v2192
        %2336 = vmatprep.subr.mxu0 %v2201
        %2337 = vmatpush1.msra.mxu0 %v2200
        %2338 = vmatprep.subr.mxu0 %v2209
        %2339 = vmatpush1.msra.mxu0 %v2208
        %2340 = vmatprep.subr.mxu0 %v2217
        %2341 = vmatpush1.msra.mxu0 %v2216
        %2342 = vmatprep.subr.mxu0 %v2225
        %2343 = vmatpush1.msra.mxu0 %v2224
        %2344 = vmatprep.subr.mxu0 %v2233
        %2345 = vmatpush1.msra.mxu0 %v2232
        %2346 = vmatprep.subr.mxu0 %v2241
        %2347 = vmatpush1.msra.mxu0 %v2240
        %2348 = vmatprep.subr.mxu0 %v2249
        %2349 = vmatpush1.msra.mxu0 %v2248
        %2350 = vmatprep.subr.mxu0 %v2257
        %2351 = vmatpush1.msra.mxu0 %v2256
        %2352 = vmatprep.subr.mxu0 %v2265
        %2353 = vmatpush1.msra.mxu0 %v2264
        %2354 = vmatprep.subr.mxu0 %v2273
        %2355 = vmatpush1.msra.mxu0 %v2272
        %2356 = vmatprep.subr.mxu0 %v2281
        %2357 = vmatpush1.msra.mxu0 %v2280
        %2358 = vmatprep.subr.mxu0 %v2289
        %2359 = vmatpush1.msra.mxu0 %v2288
        %2360 = vmatprep.mubr.f32.mxu0 %v2037
        %2361 = vmatmul.mubr.f32.gmra.mrb[0].mxu0 %v2036
        %v2362 = vpop.f32.mrb[0].mxu0
        %v2363 = vadd.f32 0.0, %v2362
        %v2364 = vpop.f32.mrb[0].mxu0
        %v2365 = vadd.f32 0.0, %v2364
        %2366 = vmatprep.mubr.f32.mxu0 %v2039
        %2367 = vmatmul.mubr.f32.gmra.mrb[0].mxu0 %v2038
        %v2368 = vpop.f32.mrb[0].mxu0
        %v2369 = vadd.f32 0.0, %v2368
        %v2370 = vpop.f32.mrb[0].mxu0
        %v2371 = vadd.f32 0.0, %v2370
        %2372 = vdwg.mxu0
        %2373 = vmatprep.subr.mxu0 %v2043
        %2374 = vmatpush1.msra.mxu0 %v2042
        %2375 = vmatprep.subr.mxu0 %v2051
        %2376 = vmatpush1.msra.mxu0 %v2050
        %2377 = vmatprep.subr.mxu0 %v2059
        %2378 = vmatpush1.msra.mxu0 %v2058
        %2379 = vmatprep.subr.mxu0 %v2067
        %2380 = vmatpush1.msra.mxu0 %v2066
        %2381 = vmatprep.subr.mxu0 %v2075
        %2382 = vmatpush1.msra.mxu0 %v2074
        %2383 = vmatprep.subr.mxu0 %v2083
        %2384 = vmatpush1.msra.mxu0 %v2082
        %2385 = vmatprep.subr.mxu0 %v2091
        %2386 = vmatpush1.msra.mxu0 %v2090
        %2387 = vmatprep.subr.mxu0 %v2099
        %2388 = vmatpush1.msra.mxu0 %v2098
        %2389 = vmatprep.subr.mxu0 %v2107
        %2390 = vmatpush1.msra.mxu0 %v2106
        %2391 = vmatprep.subr.mxu0 %v2115
        %2392 = vmatpush1.msra.mxu0 %v2114
        %2393 = vmatprep.subr.mxu0 %v2123
        %2394 = vmatpush1.msra.mxu0 %v2122
        %2395 = vmatprep.subr.mxu0 %v2131
        %2396 = vmatpush1.msra.mxu0 %v2130
        %2397 = vmatprep.subr.mxu0 %v2139
        %2398 = vmatpush1.msra.mxu0 %v2138
        %2399 = vmatprep.subr.mxu0 %v2147
        %2400 = vmatpush1.msra.mxu0 %v2146
        %2401 = vmatprep.subr.mxu0 %v2155
        %2402 = vmatpush1.msra.mxu0 %v2154
        %2403 = vmatprep.subr.mxu0 %v2163
        %2404 = vmatpush1.msra.mxu0 %v2162
        %2405 = vmatprep.subr.mxu0 %v2171
        %2406 = vmatpush1.msra.mxu0 %v2170
        %2407 = vmatprep.subr.mxu0 %v2179
        %2408 = vmatpush1.msra.mxu0 %v2178
        %2409 = vmatprep.subr.mxu0 %v2187
        %2410 = vmatpush1.msra.mxu0 %v2186
        %2411 = vmatprep.subr.mxu0 %v2195
        %2412 = vmatpush1.msra.mxu0 %v2194
        %2413 = vmatprep.subr.mxu0 %v2203
        %2414 = vmatpush1.msra.mxu0 %v2202
        %2415 = vmatprep.subr.mxu0 %v2211
        %2416 = vmatpush1.msra.mxu0 %v2210
        %2417 = vmatprep.subr.mxu0 %v2219
        %2418 = vmatpush1.msra.mxu0 %v2218
        %2419 = vmatprep.subr.mxu0 %v2227
        %2420 = vmatpush1.msra.mxu0 %v2226
        %2421 = vmatprep.subr.mxu0 %v2235
        %2422 = vmatpush1.msra.mxu0 %v2234
        %2423 = vmatprep.subr.mxu0 %v2243
        %2424 = vmatpush1.msra.mxu0 %v2242
        %2425 = vmatprep.subr.mxu0 %v2251
        %2426 = vmatpush1.msra.mxu0 %v2250
        %2427 = vmatprep.subr.mxu0 %v2259
        %2428 = vmatpush1.msra.mxu0 %v2258
        %2429 = vmatprep.subr.mxu0 %v2267
        %2430 = vmatpush1.msra.mxu0 %v2266
        %2431 = vmatprep.subr.mxu0 %v2275
        %2432 = vmatpush1.msra.mxu0 %v2274
        %2433 = vmatprep.subr.mxu0 %v2283
        %2434 = vmatpush1.msra.mxu0 %v2282
        %2435 = vmatprep.subr.mxu0 %v2291
        %2436 = vmatpush1.msra.mxu0 %v2290
        %2437 = vmatprep.mubr.f32.mxu0 %v2037
        %2438 = vmatmul.mubr.f32.gmra.mrb[0].mxu0 %v2036
        %v2439 = vpop.f32.mrb[0].mxu0
        %v2440 = vadd.f32 0.0, %v2439
        %v2441 = vpop.f32.mrb[0].mxu0
        %v2442 = vadd.f32 0.0, %v2441
        %2443 = vmatprep.mubr.f32.mxu0 %v2039
        %2444 = vmatmul.mubr.f32.gmra.mrb[0].mxu0 %v2038
        %v2445 = vpop.f32.mrb[0].mxu0
        %v2446 = vadd.f32 0.0, %v2445
        %v2447 = vpop.f32.mrb[0].mxu0
        %v2448 = vadd.f32 0.0, %v2447
        %2449 = vdwg.mxu0
        %2450 = vmatprep.subr.mxu0 %v2045
        %2451 = vmatpush1.msra.mxu0 %v2044
        %2452 = vmatprep.subr.mxu0 %v2053
        %2453 = vmatpush1.msra.mxu0 %v2052
        %2454 = vmatprep.subr.mxu0 %v2061
        %2455 = vmatpush1.msra.mxu0 %v2060
        %2456 = vmatprep.subr.mxu0 %v2069
        %2457 = vmatpush1.msra.mxu0 %v2068
        %2458 = vmatprep.subr.mxu0 %v2077
        %2459 = vmatpush1.msra.mxu0 %v2076
        %2460 = vmatprep.subr.mxu0 %v2085
        %2461 = vmatpush1.msra.mxu0 %v2084
        %2462 = vmatprep.subr.mxu0 %v2093
        %2463 = vmatpush1.msra.mxu0 %v2092
        %2464 = vmatprep.subr.mxu0 %v2101
        %2465 = vmatpush1.msra.mxu0 %v2100
        %2466 = vmatprep.subr.mxu0 %v2109
        %2467 = vmatpush1.msra.mxu0 %v2108
        %2468 = vmatprep.subr.mxu0 %v2117
        %2469 = vmatpush1.msra.mxu0 %v2116
        %2470 = vmatprep.subr.mxu0 %v2125
        %2471 = vmatpush1.msra.mxu0 %v2124
        %2472 = vmatprep.subr.mxu0 %v2133
        %2473 = vmatpush1.msra.mxu0 %v2132
        %2474 = vmatprep.subr.mxu0 %v2141
        %2475 = vmatpush1.msra.mxu0 %v2140
        %2476 = vmatprep.subr.mxu0 %v2149
        %2477 = vmatpush1.msra.mxu0 %v2148
        %2478 = vmatprep.subr.mxu0 %v2157
        %2479 = vmatpush1.msra.mxu0 %v2156
        %2480 = vmatprep.subr.mxu0 %v2165
        %2481 = vmatpush1.msra.mxu0 %v2164
        %2482 = vmatprep.subr.mxu0 %v2173
        %2483 = vmatpush1.msra.mxu0 %v2172
        %2484 = vmatprep.subr.mxu0 %v2181
        %2485 = vmatpush1.msra.mxu0 %v2180
        %2486 = vmatprep.subr.mxu0 %v2189
        %2487 = vmatpush1.msra.mxu0 %v2188
        %2488 = vmatprep.subr.mxu0 %v2197
        %2489 = vmatpush1.msra.mxu0 %v2196
        %2490 = vmatprep.subr.mxu0 %v2205
        %2491 = vmatpush1.msra.mxu0 %v2204
        %2492 = vmatprep.subr.mxu0 %v2213
        %2493 = vmatpush1.msra.mxu0 %v2212
        %2494 = vmatprep.subr.mxu0 %v2221
        %2495 = vmatpush1.msra.mxu0 %v2220
        %2496 = vmatprep.subr.mxu0 %v2229
        %2497 = vmatpush1.msra.mxu0 %v2228
        %2498 = vmatprep.subr.mxu0 %v2237
        %2499 = vmatpush1.msra.mxu0 %v2236
        %2500 = vmatprep.subr.mxu0 %v2245
        %2501 = vmatpush1.msra.mxu0 %v2244
        %2502 = vmatprep.subr.mxu0 %v2253
        %2503 = vmatpush1.msra.mxu0 %v2252
        %2504 = vmatprep.subr.mxu0 %v2261
        %2505 = vmatpush1.msra.mxu0 %v2260
        %2506 = vmatprep.subr.mxu0 %v2269
        %2507 = vmatpush1.msra.mxu0 %v2268
        %2508 = vmatprep.subr.mxu0 %v2277
        %2509 = vmatpush1.msra.mxu0 %v2276
        %2510 = vmatprep.subr.mxu0 %v2285
        %2511 = vmatpush1.msra.mxu0 %v2284
        %2512 = vmatprep.subr.mxu0 %v2293
        %2513 = vmatpush1.msra.mxu0 %v2292
        %2514 = vmatprep.mubr.f32.mxu0 %v2037
        %2515 = vmatmul.mubr.f32.gmra.mrb[0].mxu0 %v2036
        %v2516 = vpop.f32.mrb[0].mxu0
        %v2517 = vadd.f32 0.0, %v2516
        %v2518 = vpop.f32.mrb[0].mxu0
        %v2519 = vadd.f32 0.0, %v2518
        %2520 = vmatprep.mubr.f32.mxu0 %v2039
        %2521 = vmatmul.mubr.f32.gmra.mrb[0].mxu0 %v2038
        %v2522 = vpop.f32.mrb[0].mxu0
        %v2523 = vadd.f32 0.0, %v2522
        %v2524 = vpop.f32.mrb[0].mxu0
        %v2525 = vadd.f32 0.0, %v2524
        %2526 = vdwg.mxu0
        %2527 = vmatprep.subr.mxu0 %v2047
        %2528 = vmatpush1.msra.mxu0 %v2046
        %2529 = vmatprep.subr.mxu0 %v2055
        %2530 = vmatpush1.msra.mxu0 %v2054
        %2531 = vmatprep.subr.mxu0 %v2063
        %2532 = vmatpush1.msra.mxu0 %v2062
        %2533 = vmatprep.subr.mxu0 %v2071
        %2534 = vmatpush1.msra.mxu0 %v2070
        %2535 = vmatprep.subr.mxu0 %v2079
        %2536 = vmatpush1.msra.mxu0 %v2078
        %2537 = vmatprep.subr.mxu0 %v2087
        %2538 = vmatpush1.msra.mxu0 %v2086
        %2539 = vmatprep.subr.mxu0 %v2095
        %2540 = vmatpush1.msra.mxu0 %v2094
        %2541 = vmatprep.subr.mxu0 %v2103
        %2542 = vmatpush1.msra.mxu0 %v2102
        %2543 = vmatprep.subr.mxu0 %v2111
        %2544 = vmatpush1.msra.mxu0 %v2110
        %2545 = vmatprep.subr.mxu0 %v2119
        %2546 = vmatpush1.msra.mxu0 %v2118
        %2547 = vmatprep.subr.mxu0 %v2127
        %2548 = vmatpush1.msra.mxu0 %v2126
        %2549 = vmatprep.subr.mxu0 %v2135
        %2550 = vmatpush1.msra.mxu0 %v2134
        %2551 = vmatprep.subr.mxu0 %v2143
        %2552 = vmatpush1.msra.mxu0 %v2142
        %2553 = vmatprep.subr.mxu0 %v2151
        %2554 = vmatpush1.msra.mxu0 %v2150
        %2555 = vmatprep.subr.mxu0 %v2159
        %2556 = vmatpush1.msra.mxu0 %v2158
        %2557 = vmatprep.subr.mxu0 %v2167
        %2558 = vmatpush1.msra.mxu0 %v2166
        %2559 = vmatprep.subr.mxu0 %v2175
        %2560 = vmatpush1.msra.mxu0 %v2174
        %2561 = vmatprep.subr.mxu0 %v2183
        %2562 = vmatpush1.msra.mxu0 %v2182
        %2563 = vmatprep.subr.mxu0 %v2191
        %2564 = vmatpush1.msra.mxu0 %v2190
        %2565 = vmatprep.subr.mxu0 %v2199
        %2566 = vmatpush1.msra.mxu0 %v2198
        %2567 = vmatprep.subr.mxu0 %v2207
        %2568 = vmatpush1.msra.mxu0 %v2206
        %2569 = vmatprep.subr.mxu0 %v2215
        %2570 = vmatpush1.msra.mxu0 %v2214
        %2571 = vmatprep.subr.mxu0 %v2223
        %2572 = vmatpush1.msra.mxu0 %v2222
        %2573 = vmatprep.subr.mxu0 %v2231
        %2574 = vmatpush1.msra.mxu0 %v2230
        %2575 = vmatprep.subr.mxu0 %v2239
        %2576 = vmatpush1.msra.mxu0 %v2238
        %2577 = vmatprep.subr.mxu0 %v2247
        %2578 = vmatpush1.msra.mxu0 %v2246
        %2579 = vmatprep.subr.mxu0 %v2255
        %2580 = vmatpush1.msra.mxu0 %v2254
        %2581 = vmatprep.subr.mxu0 %v2263
        %2582 = vmatpush1.msra.mxu0 %v2262
        %2583 = vmatprep.subr.mxu0 %v2271
        %2584 = vmatpush1.msra.mxu0 %v2270
        %2585 = vmatprep.subr.mxu0 %v2279
        %2586 = vmatpush1.msra.mxu0 %v2278
        %2587 = vmatprep.subr.mxu0 %v2287
        %2588 = vmatpush1.msra.mxu0 %v2286
        %2589 = vmatprep.subr.mxu0 %v2295
        %2590 = vmatpush1.msra.mxu0 %v2294
        %2591 = vmatprep.mubr.f32.mxu0 %v2037
        %2592 = vmatmul.mubr.f32.gmra.mrb[0].mxu0 %v2036
        %v2593 = vpop.f32.mrb[0].mxu0
        %v2594 = vadd.f32 0.0, %v2593
        %v2595 = vpop.f32.mrb[0].mxu0
        %v2596 = vadd.f32 0.0, %v2595
        %2597 = vmatprep.mubr.f32.mxu0 %v2039
        %2598 = vmatmul.mubr.f32.gmra.mrb[0].mxu0 %v2038
        %v2599 = vpop.f32.mrb[0].mxu0
        %v2600 = vadd.f32 0.0, %v2599
        %v2601 = vpop.f32.mrb[0].mxu0
        %v2602 = vadd.f32 0.0, %v2601
        %2603 = vdwg.mxu0
        %2604 = vst [vmem:[%s233] sm:$0xff] %v2363
        %2605 = vst [vmem:[%s233 + $0x8] sm:$0xff] %v2365
        %2606 = vst [vmem:[%s233 + $0x10] sm:$0xff] %v2440
        %2607 = vst [vmem:[%s233 + $0x18] sm:$0xff] %v2442
        %2608 = vst [vmem:[%s233 + $0x20] sm:$0xff] %v2517
        %2609 = vst [vmem:[%s233 + $0x28] sm:$0xff] %v2519
        %2610 = vst [vmem:[%s233 + $0x30] sm:$0xff] %v2594
        %2611 = vst [vmem:[%s233 + $0x38] sm:$0xff] %v2596
        %2612 = vst [vmem:[%s233 + $0x40] sm:$0xff] %v2369
        %2613 = vst [vmem:[%s233 + $0x48] sm:$0xff] %v2371
        %2614 = vst [vmem:[%s233 + $0x50] sm:$0xff] %v2446
        %2615 = vst [vmem:[%s233 + $0x58] sm:$0xff] %v2448
        %2616 = vst [vmem:[%s233 + $0x60] sm:$0xff] %v2523
        %2617 = vst [vmem:[%s233 + $0x68] sm:$0xff] %v2525
        %2618 = vst [vmem:[%s233 + $0x70] sm:$0xff] %v2600
        %2619 = vst [vmem:[%s233 + $0x78] sm:$0xff] %v2602
        %s2620 = sand.u32 %s138, 1
        %s2621 = scalar_lea.sflag [#allocation4], %s2620
        %s2622 = sand.u32 %s138, 1
        %s2623 = smul.addr %s2622, 128
        %s2624 = scalar_lea.vmem [#allocation5], %s2623
        // Predicated region
        $region45: #{tpu_custom_call.1} parent=39 // pred_check
          %p2625 = pneg %p148
        $region46: #{tpu_custom_call.1} parent=39 // pred_check_branch
          %2627 = sbr.rel (%p2625) target = $region48
        $region47: #{tpu_custom_call.1} parent=39 // pred_region
          %s2628 = smul.u32 2, %s20
          %s2630 = ssub.s32 2048, 2048
          %2631 = vsyncadd %s2621, %s2630
          %s2632 = smul.addr %s2628, 8
          %s2633 = smul.addr %s2632, 128
          %s2634 = scalar_lea.hbm %s5, %s2633
          %s2635 = sshll.u32 %s2624, 4
          %s2636 = int_to_ptr.vmem [resolvable:$true] %s2635
          %2641 = dma.vmem_to_hbm [thread:$0]  %s2636, 2048, %s2634, %s2621, 1024, 1024, 64
        $region48: #{tpu_custom_call.1} parent=39 // pred_fallthru
          _
      $region40: #{tpu_custom_call.1} parent=5 // pred_fallthru
        _
      %p2642 = scmp.le.s32.totalorder 2, %s15
      // Predicated region
      $region49: #{tpu_custom_call.1} parent=5 // pred_check
        %p2643 = pneg %p2642
      $region50: #{tpu_custom_call.1} parent=5 // pred_check_branch
        %2645 = sbr.rel (%p2643) target = $region52
      $region51: #{tpu_custom_call.1} parent=5 // pred_region
        %s2646 = ssub.s32 %s15, 2
        // Predicated region
        $region53: #{tpu_custom_call.1} parent=51 // pred_check
          %p2647 = pneg %p154
        $region54: #{tpu_custom_call.1} parent=51 // pred_check_branch
          %2649 = sbr.rel (%p2647) target = $region56
        $region55: #{tpu_custom_call.1} parent=51 // pred_region
          %s2650 = sand.u32 %s139, 1
          %s2651 = scalar_lea.sflag [#allocation4], %s2650
          %s2652 = sand.u32 %s139, 1
          %s2653 = smul.addr %s2652, 128
          %s2654 = scalar_lea.vmem [#allocation5], %s2653
          %2655 = dma.done %s2651, 2048
        $region56: #{tpu_custom_call.1} parent=51 // pred_fallthru
          _
      $region52: #{tpu_custom_call.1} parent=5 // pred_fallthru
        _
    $region6: #{tpu_custom_call.1} parent=1 // loop_footer
      %s19 = sadd.s32 1, %s15
    $region7: #{tpu_custom_call.1} parent=1 // loop_footer_branch
      %14 = sbr.rel target = $region3
    $region8: #{tpu_custom_call.1} parent=1 // loop_exit
      _
    %2656 = vsyncpa [#allocation3], 1
    %s2657 = scalar_lea.sflag [#allocation3], 1
    %2658 = vsyncpa %s2657, 1
    %2659 = vsyncpa [#allocation4], 1
    %s2660 = scalar_lea.sflag [#allocation4], 1
    %2661 = vsyncpa %s2660, 1

</llo_original>
